<compile_context>
chip_gen: v7x
topology: tpu7x:2x2x1
jax: 0.10.0
libtpu: 0.0.40
codegen_flags: <defaults>
</compile_context>

<pallas_src>
import functools

import numpy as np
import jax
import jax.numpy as jnp
from jax.experimental import pallas as pl
from jax.experimental.pallas import tpu as pltpu

_EPS = 1e-5  # BatchNorm1d default eps


def _round_up(n, m):
    return ((n + m - 1) // m) * m


# --------------------------------------------------------------------------
# Pallas kernel: whole ResBlock forward on lane-dense, 128-aligned 2-D slabs.
# --------------------------------------------------------------------------
def _resblock_kernel(xa_ref, xtap_ref, yph_ref, w1_ref, w2_ref, wy_ref,
                     mb_ref, out_ref, *, n_b, n_l, n_od, n_k, bod_pad, eps):
    f32 = jnp.float32
    n_bl = n_b * n_l            # true element count for BatchNorm #1
    n_bod = n_b * n_od          # true element count for BatchNorm #2

    # ---- x branch, stage 1: x1 'same' conv at every (b, l) position -------
    # (used only for the BatchNorm batch statistics).  K shifted static views
    # of one compact slab; split-accumulate dots, no stacked-tap operand.
    xa = xa_ref[...]
    c1a = None
    for k in range(n_k):
        part = jnp.dot(w1_ref[k], xa[:, k * n_b:k * n_b + n_bl],
                       preferred_element_type=f32)
        c1a = part if c1a is None else c1a + part

    # BatchNorm1d(affine=False), training batch stats, biased variance,
    # centered two-pass form (avoids E[x^2] - mean^2 cancellation).
    mean1 = jnp.sum(c1a, axis=1, keepdims=True) * (1.0 / n_bl)
    d1 = c1a - mean1
    var1 = jnp.sum(d1 * d1, axis=1, keepdims=True) * (1.0 / n_bl)
    inv_std1 = jax.lax.rsqrt(var1 + eps)

    # ---- x branch, stage 2: x1 conv at the positions the strided x2 conv
    # reads.  The operand holds the 2K-1 distinct offset blocks; tap k1 is the
    # 128-aligned window of K consecutive blocks starting at block k1.
    c1b = None
    for k in range(n_k):
        part = jnp.dot(w1_ref[k],
                       xtap_ref[:, k * bod_pad:(k + n_k) * bod_pad],
                       preferred_element_type=f32)
        c1b = part if c1b is None else c1b + part

    # BN + ReLU (Dropout = identity); the broadcast mask row zeroes taps that
    # fall in x2's explicit zero padding of h and the 128-alignment pad cols.
    h = (jnp.maximum((c1b - mean1) * inv_std1, 0.0) * mb_ref[...])
    h = h.astype(w2_ref.dtype)

    # x2 strided conv: split-accumulate over taps (no concatenate relayout);
    # every slice starts on a 128-aligned column.
    xb = None
    for k in range(n_k):
        part = jnp.dot(w2_ref[k], h[:, k * bod_pad:(k + 1) * bod_pad],
                       preferred_element_type=f32)
        xb = part if xb is None else xb + part

    # ---- y branch (skip connection): MaxPool = elementwise max over the
    # phase slabs, then the y1 'same' conv via K shifted views.
    pooled = jnp.max(yph_ref[...], axis=0)
    yb = None
    for k in range(n_k):
        part = jnp.dot(wy_ref[k], pooled[:, k * n_b:k * n_b + bod_pad],
                       preferred_element_type=f32)
        yb = part if yb is None else yb + part

    # ---- merge: xy = ReLU(BN(x + y)) ; y_out = x ---------------------------
    s = xb + yb
    col = jax.lax.broadcasted_iota(jnp.int32, s.shape, 1)
    valid = col < n_bod                               # real (j, b) columns
    sm = jnp.where(valid, s, 0.0)
    mean2 = jnp.sum(sm, axis=1, keepdims=True) * (1.0 / n_bod)
    d2 = jnp.where(valid, s - mean2, 0.0)
    var2 = jnp.sum(d2 * d2, axis=1, keepdims=True) * (1.0 / n_bod)
    inv_std2 = jax.lax.rsqrt(var2 + eps)
    xy = jnp.where(valid, jnp.maximum((s - mean2) * inv_std2, 0.0), 0.0)

    # Packed lane-dense output: [ xy | xb ] in one (Cout, 2*bod_pad) slab,
    # two 128-aligned full-width stores.
    out_ref[:, 0:bod_pad] = xy
    out_ref[:, bod_pad:2 * bod_pad] = xb


# --------------------------------------------------------------------------
# Wrapper: index plumbing (padding / block building) + pallas_call.
# --------------------------------------------------------------------------
def resblock_forward(x, y, wx1, wx2, wy1, *, input_dim, out_dim, kernel_size=3,
                     operand_dtype=jnp.float32):
    B, Cin, L = x.shape
    Cout = wx1.shape[0]
    K = kernel_size
    assert L == input_dim
    assert K % 2 == 1, "padding='same' path implemented for odd kernel sizes"
    p1 = (K - 1) // 2                       # 'same' padding of x1 / y1
    ds = input_dim // out_dim               # x2 stride == MaxPool size
    Od = out_dim

    # explicit zero padding applied before the strided x2 conv
    pad_x = max(int(np.ceil(0.5 * (L // Od * (Od - 1) - L + K))), 0)
    assert (L + 2 * pad_x - K) // ds + 1 == Od

    # explicit zero padding + MaxPool for the skip connection
    if ds > 1:
        pad_y = max(int(np.ceil(0.5 * (L // Od * (Od - 1) - L + ds))), 0)
        assert (L + 2 * pad_y - ds) // ds + 1 == Od
    elif ds == 1:
        pad_y = 0
        assert L == Od
    else:
        raise ValueError("Size of input should always decrease.")

    BL, BOd = B * L, B * Od
    BOd_pad = _round_up(BOd, 128)

    # ---- operand 1: compact zero-padded x slab for the x1 'same' conv -----
    # column = p*B + b, x position = p - p1 (zeros outside [0, L-1]); the K
    # tap operands are built in-kernel -> no K-fold duplication in HBM.
    NA = (L + 2 * p1) * B
    NA_pad = _round_up(NA, 128)
    xa = jnp.pad(x, ((0, 0), (0, 0), (p1, p1)))              # (B, Cin, L+2p1)
    xa = xa.transpose(1, 2, 0).reshape(Cin, NA)
    xa = jnp.pad(xa, ((0, 0), (0, NA_pad - NA)))

    # ---- operand 2: x values at the positions read by (x1 tap, x2 tap)
    # pairs.  Only the 2K-1 distinct combined offsets are stored, each as a
    # 128-aligned column block with layout j*B + b.
    M = 2 * K - 1
    padl = pad_x + p1
    padr = max(ds * (Od - 1) + (M - 1) - padl - (L - 1), 0)
    x_pb = jnp.pad(x, ((0, 0), (0, 0), (padl, padr)))
    blocks = [x_pb[:, :, m:m + ds * (Od - 1) + 1:ds] for m in range(M)]
    xt = jnp.stack(blocks, axis=0)                           # (M, B, Cin, Od)
    xt = xt.transpose(0, 2, 3, 1).reshape(M, Cin, BOd)       # col = j*B + b
    xt = jnp.pad(xt, ((0, 0), (0, 0), (0, BOd_pad - BOd)))
    xtap = xt.transpose(1, 0, 2).reshape(Cin, M * BOd_pad)

    # ---- operand 3: MaxPool phase slabs for the skip connection ------------
    NY_pad = _round_up(BOd_pad + 2 * p1 * B, 128)
    y_pad = jnp.pad(y, ((0, 0), (0, 0), (pad_y, pad_y))) if pad_y else y
    phases = []
    for w in range(ds):
        ph = y_pad[:, :, w:w + ds * (Od - 1) + 1:ds]         # (B, Cin, Od)
        ph = ph.transpose(1, 2, 0).reshape(Cin, BOd)         # col = j*B + b
        ph = jnp.pad(ph, ((0, 0), (p1 * B, NY_pad - p1 * B - BOd)))
        phases.append(ph)
    yph = jnp.stack(phases, axis=0)                          # (ds, Cin, NY_pad)

    # ---- x2 zero-padding / alignment mask: one broadcast row ---------------
    pos2 = ds * np.arange(Od)[None, :] + (np.arange(K) - pad_x)[:, None]
    valid_ko = (pos2 >= 0) & (pos2 < L)                      # (K, Od)
    mb = np.zeros((1, K * BOd_pad), np.float32)
    for k2 in range(K):
        mb[0, k2 * BOd_pad:k2 * BOd_pad + BOd] = np.repeat(
            valid_ko[k2].astype(np.float32), B)
    mb = jnp.asarray(mb)

    # ---- weights: one (K, Cout, *) stack each, tap-indexed in-kernel -------
    w1 = jnp.transpose(wx1, (2, 0, 1))                       # (K, Cout, Cin)
    w2 = jnp.transpose(wx2, (2, 0, 1))                       # (K, Cout, Cout)
    wy = jnp.transpose(wy1, (2, 0, 1))                       # (K, Cout, Cin)

    if operand_dtype != jnp.float32:
        # bf16 MXU operands (v6e/v7x); stats / accumulation stay f32.
        xa, xtap, yph = (a.astype(operand_dtype) for a in (xa, xtap, yph))
        w1, w2, wy = (a.astype(operand_dtype) for a in (w1, w2, wy))

    kernel = functools.partial(_resblock_kernel, n_b=B, n_l=L, n_od=Od, n_k=K,
                               bod_pad=BOd_pad, eps=_EPS)

    in_bytes = sum(int(np.prod(a.shape)) * a.dtype.itemsize
                   for a in (xa, xtap, yph, w1, w2, wy, mb))
    out_bytes = Cout * 2 * BOd_pad * 4
    vmem_limit = int(min(max(6 * (in_bytes + out_bytes), 32 << 20), 64 << 20))
    flops = 2 * K * Cout * (Cin * BL + Cin * K * BOd_pad + Cout * BOd_pad
                            + Cin * BOd_pad)

    vmem = pl.BlockSpec(memory_space=pltpu.MemorySpace.VMEM)
    out = pl.pallas_call(
        kernel,
        out_shape=jax.ShapeDtypeStruct((Cout, 2 * BOd_pad), jnp.float32),
        in_specs=[vmem] * 7,
        out_specs=vmem,
        compiler_params=pltpu.CompilerParams(vmem_limit_bytes=vmem_limit),
        cost_estimate=pl.CostEstimate(flops=flops, transcendentals=2 * Cout,
                                      bytes_accessed=in_bytes + out_bytes),
    )(xa, xtap, yph, w1, w2, wy, mb)

    # layout plumbing back to NCL
    xy = out[:, :BOd].reshape(Cout, Od, B).transpose(2, 0, 1)
    y_out = out[:, BOd_pad:BOd_pad + BOd].reshape(Cout, Od, B).transpose(2, 0, 1)
    return [xy, y_out]


# --------------------------------------------------------------------------
# Pure-JAX reference (independent implementation, validation only).
# --------------------------------------------------------------------------
def _reference(x, y, wx1, wx2, wy1, *, input_dim, out_dim, kernel_size=3):
    ds = input_dim // out_dim
    L = x.shape[-1]

    def conv1d(v, w, stride=1, pad=0):
        return jax.lax.conv_general_dilated(
            v, w, window_strides=(stride,), padding=[(pad, pad)],
            dimension_numbers=("NCH", "OIH", "NCH"))

    def bn_relu(v):
        mean = v.mean(axis=(0, 2), keepdims=True)
        var = ((v - mean) ** 2).mean(axis=(0, 2), keepdims=True)
        return jnp.maximum((v - mean) / jnp.sqrt(var + _EPS), 0.0)

    # y branch
    if ds > 1:
        pad_y = max(int(np.ceil(0.5 * (L // out_dim * (out_dim - 1) - L + ds))), 0)
        yp = jnp.pad(y, ((0, 0), (0, 0), (pad_y, pad_y)))
        Lpool = (yp.shape[-1] - ds) // ds + 1
        yp = yp[..., : Lpool * ds]
        pooled = yp.reshape(yp.shape[0], yp.shape[1], Lpool, ds).max(axis=-1)
    else:
        pooled = y
    yb = conv1d(pooled, wy1, 1, (kernel_size - 1) // 2)

    # x branch
    h = bn_relu(conv1d(x, wx1, 1, (kernel_size - 1) // 2))
    pad_x = max(int(np.ceil(0.5 * (L // out_dim * (out_dim - 1) - L + kernel_size))), 0)
    hp = jnp.pad(h, ((0, 0), (0, 0), (pad_x, pad_x)))
    xb = conv1d(hp, wx2, stride=ds, pad=0)

    return [bn_relu(xb + yb), xb]


if __name__ == "__main__":
    key = jax.random.PRNGKey(0)

    def conv_init(k, shape):
        fan_in = shape[1] * shape[2]
        bound = 1.0 / np.sqrt(fan_in)
        return jax.random.uniform(k, shape, jnp.float32, -bound, bound)

    configs = [
        # (B, input_dim, input_channels, out_channels, out_dim, K)
        (2, 16, 4, 8, 8, 3),     # downsample = 2 (MaxPool skip path)
        (2, 8, 4, 8, 8, 3),      # downsample = 1 (identity skip path)
        (2, 128, 4, 8, 64, 3),   # B*out_dim == 128 (exact lane tile)
        (2, 64, 8, 16, 32, 3),   # more channels
    ]

    for (B, input_dim, input_channels, out_channels, out_dim, K) in configs:
        key, kx, ky, k1, k2, k3 = jax.random.split(key, 6)
        x = jax.random.normal(kx, (B, input_channels, input_dim), jnp.float32)
        y = jax.random.normal(ky, (B, input_channels, input_dim), jnp.float32)

        # Conv1d weights (Cout, Cin, K), bias=False everywhere
        wx1 = conv_init(k1, (out_channels, input_channels, K))
        wx2 = conv_init(k2, (out_channels, out_channels, K))
        wy1 = conv_init(k3, (out_channels, input_channels, K))

        xy, y_out = resblock_forward(x, y, wx1, wx2, wy1,
                                     input_dim=input_dim, out_dim=out_dim,
                                     kernel_size=K)
        jax.block_until_ready((xy, y_out))

        xy_ref, y_ref = _reference(x, y, wx1, wx2, wy1,
                                   input_dim=input_dim, out_dim=out_dim,
                                   kernel_size=K)
        assert xy.shape == (B, out_channels, out_dim)
        assert y_out.shape == (B, out_channels, out_dim)
        np.testing.assert_allclose(np.asarray(xy), np.asarray(xy_ref),
                                   rtol=1e-4, atol=1e-4)
        np.testing.assert_allclose(np.asarray(y_out), np.asarray(y_ref),
                                   rtol=1e-4, atol=1e-4)

    print("KERNEL_OK")
</pallas_src>

<mosaic_0001>
module attributes {stable_mosaic.version = 11 : i64} {
  func.func @_resblock_kernel(%arg0: memref<4x128xf32, #tpu.memory_space<vmem>>, %arg1: memref<4x640xf32, #tpu.memory_space<vmem>>, %arg2: memref<2x4x256xf32, #tpu.memory_space<vmem>>, %arg3: memref<3x8x4xf32, #tpu.memory_space<vmem>>, %arg4: memref<3x8x8xf32, #tpu.memory_space<vmem>>, %arg5: memref<3x8x4xf32, #tpu.memory_space<vmem>>, %arg6: memref<1x384xf32, #tpu.memory_space<vmem>>, %arg7: memref<8x256xf32, #tpu.memory_space<vmem>>) attributes {dimension_semantics = [], scalar_prefetch = 0 : i64, scratch_operands = 0 : i64, tpu.core_type = #tpu.core_type<tc>} {
    %c0 = arith.constant 0 : index
    %c0_0 = arith.constant 0 : index
    %0 = vector.load %arg0[%c0, %c0_0] : memref<4x128xf32, #tpu.memory_space<vmem>>, vector<4x128xf32>
    %c0_1 = arith.constant 0 : index
    %c0_2 = arith.constant 0 : index
    %c0_3 = arith.constant 0 : index
    %1 = vector.load %arg3[%c0_1, %c0_2, %c0_3] : memref<3x8x4xf32, #tpu.memory_space<vmem>>, vector<1x8x4xf32>
    %2 = vector.shape_cast %1 : vector<1x8x4xf32> to vector<8x4xf32>
    %3 = vector.extract_strided_slice %0 {offsets = [0, 0], sizes = [4, 32], strides = [1, 1]} : vector<4x128xf32> to vector<4x32xf32>
    %cst = arith.constant dense<0.000000e+00> : vector<8x32xf32>
    %4 = tpu.matmul %2, %3, %cst {dimension_numbers = #tpu.dot_dimension_numbers<[1], [0], [0], [1], [0, 0, 1, 1], [], []>} : vector<8x4xf32>, vector<4x32xf32>, vector<8x32xf32> -> vector<8x32xf32>
    %c1 = arith.constant 1 : index
    %c0_4 = arith.constant 0 : index
    %c0_5 = arith.constant 0 : index
    %5 = vector.load %arg3[%c1, %c0_4, %c0_5] : memref<3x8x4xf32, #tpu.memory_space<vmem>>, vector<1x8x4xf32>
    %6 = vector.shape_cast %5 : vector<1x8x4xf32> to vector<8x4xf32>
    %7 = vector.extract_strided_slice %0 {offsets = [0, 2], sizes = [4, 32], strides = [1, 1]} : vector<4x128xf32> to vector<4x32xf32>
    %cst_6 = arith.constant dense<0.000000e+00> : vector<8x32xf32>
    %8 = tpu.matmul %6, %7, %cst_6 {dimension_numbers = #tpu.dot_dimension_numbers<[1], [0], [0], [1], [0, 0, 1, 1], [], []>} : vector<8x4xf32>, vector<4x32xf32>, vector<8x32xf32> -> vector<8x32xf32>
    %9 = arith.addf %4, %8 : vector<8x32xf32>
    %c2 = arith.constant 2 : index
    %c0_7 = arith.constant 0 : index
    %c0_8 = arith.constant 0 : index
    %10 = vector.load %arg3[%c2, %c0_7, %c0_8] : memref<3x8x4xf32, #tpu.memory_space<vmem>>, vector<1x8x4xf32>
    %11 = vector.shape_cast %10 : vector<1x8x4xf32> to vector<8x4xf32>
    %12 = vector.extract_strided_slice %0 {offsets = [0, 4], sizes = [4, 32], strides = [1, 1]} : vector<4x128xf32> to vector<4x32xf32>
    %cst_9 = arith.constant dense<0.000000e+00> : vector<8x32xf32>
    %13 = tpu.matmul %11, %12, %cst_9 {dimension_numbers = #tpu.dot_dimension_numbers<[1], [0], [0], [1], [0, 0, 1, 1], [], []>} : vector<8x4xf32>, vector<4x32xf32>, vector<8x32xf32> -> vector<8x32xf32>
    %14 = arith.addf %9, %13 : vector<8x32xf32>
    %cst_10 = arith.constant dense<0.000000e+00> : vector<8xf32>
    %15 = vector.multi_reduction <add>, %14, %cst_10 [1] : vector<8x32xf32> to vector<8xf32>
    %16 = vector.shape_cast %15 : vector<8xf32> to vector<8x1xf32>
    %cst_11 = arith.constant 3.125000e-02 : f32
    %17 = vector.broadcast %cst_11 : f32 to vector<8x1xf32>
    %18 = arith.mulf %16, %17 : vector<8x1xf32>
    %19 = vector.broadcast %18 : vector<8x1xf32> to vector<8x32xf32>
    %20 = arith.subf %14, %19 : vector<8x32xf32>
    %21 = arith.mulf %20, %20 : vector<8x32xf32>
    %cst_12 = arith.constant dense<0.000000e+00> : vector<8xf32>
    %22 = vector.multi_reduction <add>, %21, %cst_12 [1] : vector<8x32xf32> to vector<8xf32>
    %23 = vector.shape_cast %22 : vector<8xf32> to vector<8x1xf32>
    %cst_13 = arith.constant 3.125000e-02 : f32
    %24 = vector.broadcast %cst_13 : f32 to vector<8x1xf32>
    %25 = arith.mulf %23, %24 : vector<8x1xf32>
    %cst_14 = arith.constant 9.99999974E-6 : f32
    %26 = vector.broadcast %cst_14 : f32 to vector<8x1xf32>
    %27 = arith.addf %25, %26 : vector<8x1xf32>
    %28 = math.rsqrt %27 : vector<8x1xf32>
    %c0_15 = arith.constant 0 : index
    %c0_16 = arith.constant 0 : index
    %c0_17 = arith.constant 0 : index
    %29 = vector.load %arg3[%c0_15, %c0_16, %c0_17] : memref<3x8x4xf32, #tpu.memory_space<vmem>>, vector<1x8x4xf32>
    %30 = vector.shape_cast %29 : vector<1x8x4xf32> to vector<8x4xf32>
    %c0_18 = arith.constant 0 : index
    %c0_19 = arith.constant 0 : index
    %31 = vector.load %arg1[%c0_18, %c0_19] : memref<4x640xf32, #tpu.memory_space<vmem>>, vector<4x384xf32>
    %cst_20 = arith.constant dense<0.000000e+00> : vector<8x384xf32>
    %32 = tpu.matmul %30, %31, %cst_20 {dimension_numbers = #tpu.dot_dimension_numbers<[1], [0], [0], [1], [0, 0, 1, 1], [], []>} : vector<8x4xf32>, vector<4x384xf32>, vector<8x384xf32> -> vector<8x384xf32>
    %c1_21 = arith.constant 1 : index
    %c0_22 = arith.constant 0 : index
    %c0_23 = arith.constant 0 : index
    %33 = vector.load %arg3[%c1_21, %c0_22, %c0_23] : memref<3x8x4xf32, #tpu.memory_space<vmem>>, vector<1x8x4xf32>
    %34 = vector.shape_cast %33 : vector<1x8x4xf32> to vector<8x4xf32>
    %c0_24 = arith.constant 0 : index
    %c128 = arith.constant 128 : index
    %35 = vector.load %arg1[%c0_24, %c128] : memref<4x640xf32, #tpu.memory_space<vmem>>, vector<4x384xf32>
    %cst_25 = arith.constant dense<0.000000e+00> : vector<8x384xf32>
    %36 = tpu.matmul %34, %35, %cst_25 {dimension_numbers = #tpu.dot_dimension_numbers<[1], [0], [0], [1], [0, 0, 1, 1], [], []>} : vector<8x4xf32>, vector<4x384xf32>, vector<8x384xf32> -> vector<8x384xf32>
    %37 = arith.addf %32, %36 : vector<8x384xf32>
    %c2_26 = arith.constant 2 : index
    %c0_27 = arith.constant 0 : index
    %c0_28 = arith.constant 0 : index
    %38 = vector.load %arg3[%c2_26, %c0_27, %c0_28] : memref<3x8x4xf32, #tpu.memory_space<vmem>>, vector<1x8x4xf32>
    %39 = vector.shape_cast %38 : vector<1x8x4xf32> to vector<8x4xf32>
    %c0_29 = arith.constant 0 : index
    %c256 = arith.constant 256 : index
    %40 = vector.load %arg1[%c0_29, %c256] : memref<4x640xf32, #tpu.memory_space<vmem>>, vector<4x384xf32>
    %cst_30 = arith.constant dense<0.000000e+00> : vector<8x384xf32>
    %41 = tpu.matmul %39, %40, %cst_30 {dimension_numbers = #tpu.dot_dimension_numbers<[1], [0], [0], [1], [0, 0, 1, 1], [], []>} : vector<8x4xf32>, vector<4x384xf32>, vector<8x384xf32> -> vector<8x384xf32>
    %42 = arith.addf %37, %41 : vector<8x384xf32>
    %43 = vector.broadcast %18 : vector<8x1xf32> to vector<8x384xf32>
    %44 = arith.subf %42, %43 : vector<8x384xf32>
    %45 = vector.broadcast %28 : vector<8x1xf32> to vector<8x384xf32>
    %46 = arith.mulf %44, %45 : vector<8x384xf32>
    %cst_31 = arith.constant 0.000000e+00 : f32
    %47 = vector.broadcast %cst_31 : f32 to vector<8x384xf32>
    %48 = arith.maximumf %46, %47 : vector<8x384xf32>
    %c0_32 = arith.constant 0 : index
    %c0_33 = arith.constant 0 : index
    %49 = vector.load %arg6[%c0_32, %c0_33] : memref<1x384xf32, #tpu.memory_space<vmem>>, vector<1x384xf32>
    %50 = vector.broadcast %49 : vector<1x384xf32> to vector<8x384xf32>
    %51 = arith.mulf %48, %50 : vector<8x384xf32>
    %c0_34 = arith.constant 0 : index
    %c0_35 = arith.constant 0 : index
    %c0_36 = arith.constant 0 : index
    %52 = vector.load %arg4[%c0_34, %c0_35, %c0_36] : memref<3x8x8xf32, #tpu.memory_space<vmem>>, vector<1x8x8xf32>
    %53 = vector.shape_cast %52 : vector<1x8x8xf32> to vector<8x8xf32>
    %54 = vector.extract_strided_slice %51 {offsets = [0, 0], sizes = [8, 128], strides = [1, 1]} : vector<8x384xf32> to vector<8x128xf32>
    %cst_37 = arith.constant dense<0.000000e+00> : vector<8x128xf32>
    %55 = tpu.matmul %53, %54, %cst_37 {dimension_numbers = #tpu.dot_dimension_numbers<[1], [0], [0], [1], [0, 0, 1, 1], [], []>} : vector<8x8xf32>, vector<8x128xf32>, vector<8x128xf32> -> vector<8x128xf32>
    %c1_38 = arith.constant 1 : index
    %c0_39 = arith.constant 0 : index
    %c0_40 = arith.constant 0 : index
    %56 = vector.load %arg4[%c1_38, %c0_39, %c0_40] : memref<3x8x8xf32, #tpu.memory_space<vmem>>, vector<1x8x8xf32>
    %57 = vector.shape_cast %56 : vector<1x8x8xf32> to vector<8x8xf32>
    %58 = vector.extract_strided_slice %51 {offsets = [0, 128], sizes = [8, 128], strides = [1, 1]} : vector<8x384xf32> to vector<8x128xf32>
    %cst_41 = arith.constant dense<0.000000e+00> : vector<8x128xf32>
    %59 = tpu.matmul %57, %58, %cst_41 {dimension_numbers = #tpu.dot_dimension_numbers<[1], [0], [0], [1], [0, 0, 1, 1], [], []>} : vector<8x8xf32>, vector<8x128xf32>, vector<8x128xf32> -> vector<8x128xf32>
    %60 = arith.addf %55, %59 : vector<8x128xf32>
    %c2_42 = arith.constant 2 : index
    %c0_43 = arith.constant 0 : index
    %c0_44 = arith.constant 0 : index
    %61 = vector.load %arg4[%c2_42, %c0_43, %c0_44] : memref<3x8x8xf32, #tpu.memory_space<vmem>>, vector<1x8x8xf32>
    %62 = vector.shape_cast %61 : vector<1x8x8xf32> to vector<8x8xf32>
    %63 = vector.extract_strided_slice %51 {offsets = [0, 256], sizes = [8, 128], strides = [1, 1]} : vector<8x384xf32> to vector<8x128xf32>
    %cst_45 = arith.constant dense<0.000000e+00> : vector<8x128xf32>
    %64 = tpu.matmul %62, %63, %cst_45 {dimension_numbers = #tpu.dot_dimension_numbers<[1], [0], [0], [1], [0, 0, 1, 1], [], []>} : vector<8x8xf32>, vector<8x128xf32>, vector<8x128xf32> -> vector<8x128xf32>
    %65 = arith.addf %60, %64 : vector<8x128xf32>
    %c0_46 = arith.constant 0 : index
    %c0_47 = arith.constant 0 : index
    %c0_48 = arith.constant 0 : index
    %66 = vector.load %arg2[%c0_46, %c0_47, %c0_48] : memref<2x4x256xf32, #tpu.memory_space<vmem>>, vector<2x4x256xf32>
    %cst_49 = arith.constant dense<0xFF800000> : vector<4x256xf32>
    %67 = vector.multi_reduction <maximumf>, %66, %cst_49 [0] : vector<2x4x256xf32> to vector<4x256xf32>
    %c0_50 = arith.constant 0 : index
    %c0_51 = arith.constant 0 : index
    %c0_52 = arith.constant 0 : index
    %68 = vector.load %arg5[%c0_50, %c0_51, %c0_52] : memref<3x8x4xf32, #tpu.memory_space<vmem>>, vector<1x8x4xf32>
    %69 = vector.shape_cast %68 : vector<1x8x4xf32> to vector<8x4xf32>
    %70 = vector.extract_strided_slice %67 {offsets = [0, 0], sizes = [4, 128], strides = [1, 1]} : vector<4x256xf32> to vector<4x128xf32>
    %cst_53 = arith.constant dense<0.000000e+00> : vector<8x128xf32>
    %71 = tpu.matmul %69, %70, %cst_53 {dimension_numbers = #tpu.dot_dimension_numbers<[1], [0], [0], [1], [0, 0, 1, 1], [], []>} : vector<8x4xf32>, vector<4x128xf32>, vector<8x128xf32> -> vector<8x128xf32>
    %c1_54 = arith.constant 1 : index
    %c0_55 = arith.constant 0 : index
    %c0_56 = arith.constant 0 : index
    %72 = vector.load %arg5[%c1_54, %c0_55, %c0_56] : memref<3x8x4xf32, #tpu.memory_space<vmem>>, vector<1x8x4xf32>
    %73 = vector.shape_cast %72 : vector<1x8x4xf32> to vector<8x4xf32>
    %74 = vector.extract_strided_slice %67 {offsets = [0, 2], sizes = [4, 128], strides = [1, 1]} : vector<4x256xf32> to vector<4x128xf32>
    %cst_57 = arith.constant dense<0.000000e+00> : vector<8x128xf32>
    %75 = tpu.matmul %73, %74, %cst_57 {dimension_numbers = #tpu.dot_dimension_numbers<[1], [0], [0], [1], [0, 0, 1, 1], [], []>} : vector<8x4xf32>, vector<4x128xf32>, vector<8x128xf32> -> vector<8x128xf32>
    %76 = arith.addf %71, %75 : vector<8x128xf32>
    %c2_58 = arith.constant 2 : index
    %c0_59 = arith.constant 0 : index
    %c0_60 = arith.constant 0 : index
    %77 = vector.load %arg5[%c2_58, %c0_59, %c0_60] : memref<3x8x4xf32, #tpu.memory_space<vmem>>, vector<1x8x4xf32>
    %78 = vector.shape_cast %77 : vector<1x8x4xf32> to vector<8x4xf32>
    %79 = vector.extract_strided_slice %67 {offsets = [0, 4], sizes = [4, 128], strides = [1, 1]} : vector<4x256xf32> to vector<4x128xf32>
    %cst_61 = arith.constant dense<0.000000e+00> : vector<8x128xf32>
    %80 = tpu.matmul %78, %79, %cst_61 {dimension_numbers = #tpu.dot_dimension_numbers<[1], [0], [0], [1], [0, 0, 1, 1], [], []>} : vector<8x4xf32>, vector<4x128xf32>, vector<8x128xf32> -> vector<8x128xf32>
    %81 = arith.addf %76, %80 : vector<8x128xf32>
    %82 = arith.addf %65, %81 : vector<8x128xf32>
    %83 = tpu.iota {dimensions = array<i32: 1>} : vector<8x128xi32>
    %c16_i32 = arith.constant 16 : i32
    %84 = vector.broadcast %c16_i32 : i32 to vector<8x128xi32>
    %85 = arith.cmpi slt, %83, %84 : vector<8x128xi32>
    %cst_62 = arith.constant 0.000000e+00 : f32
    %86 = vector.broadcast %cst_62 : f32 to vector<8x128xf32>
    %87 = arith.select %85, %82, %86 : vector<8x128xi1>, vector<8x128xf32>
    %cst_63 = arith.constant dense<0.000000e+00> : vector<8xf32>
    %88 = vector.multi_reduction <add>, %87, %cst_63 [1] : vector<8x128xf32> to vector<8xf32>
    %89 = vector.shape_cast %88 : vector<8xf32> to vector<8x1xf32>
    %cst_64 = arith.constant 6.250000e-02 : f32
    %90 = vector.broadcast %cst_64 : f32 to vector<8x1xf32>
    %91 = arith.mulf %89, %90 : vector<8x1xf32>
    %92 = vector.broadcast %91 : vector<8x1xf32> to vector<8x128xf32>
    %93 = arith.subf %82, %92 : vector<8x128xf32>
    %cst_65 = arith.constant 0.000000e+00 : f32
    %94 = vector.broadcast %cst_65 : f32 to vector<8x128xf32>
    %95 = arith.select %85, %93, %94 : vector<8x128xi1>, vector<8x128xf32>
    %96 = arith.mulf %95, %95 : vector<8x128xf32>
    %cst_66 = arith.constant dense<0.000000e+00> : vector<8xf32>
    %97 = vector.multi_reduction <add>, %96, %cst_66 [1] : vector<8x128xf32> to vector<8xf32>
    %98 = vector.shape_cast %97 : vector<8xf32> to vector<8x1xf32>
    %cst_67 = arith.constant 6.250000e-02 : f32
    %99 = vector.broadcast %cst_67 : f32 to vector<8x1xf32>
    %100 = arith.mulf %98, %99 : vector<8x1xf32>
    %cst_68 = arith.constant 9.99999974E-6 : f32
    %101 = vector.broadcast %cst_68 : f32 to vector<8x1xf32>
    %102 = arith.addf %100, %101 : vector<8x1xf32>
    %103 = math.rsqrt %102 : vector<8x1xf32>
    %104 = vector.broadcast %91 : vector<8x1xf32> to vector<8x128xf32>
    %105 = arith.subf %82, %104 : vector<8x128xf32>
    %106 = vector.broadcast %103 : vector<8x1xf32> to vector<8x128xf32>
    %107 = arith.mulf %105, %106 : vector<8x128xf32>
    %cst_69 = arith.constant 0.000000e+00 : f32
    %108 = vector.broadcast %cst_69 : f32 to vector<8x128xf32>
    %109 = arith.maximumf %107, %108 : vector<8x128xf32>
    %cst_70 = arith.constant 0.000000e+00 : f32
    %110 = vector.broadcast %cst_70 : f32 to vector<8x128xf32>
    %111 = arith.select %85, %109, %110 : vector<8x128xi1>, vector<8x128xf32>
    %c0_71 = arith.constant 0 : index
    %c0_72 = arith.constant 0 : index
    %112 = vector.load %arg7[%c0_71, %c0_72] : memref<8x256xf32, #tpu.memory_space<vmem>>, vector<8x128xf32>
    tpu.vector_store %arg7[%c0_71, %c0_72], %111 {strides = array<i32>} : memref<8x256xf32, #tpu.memory_space<vmem>>, vector<8x128xf32>,
    %c0_73 = arith.constant 0 : index
    %c128_74 = arith.constant 128 : index
    %113 = vector.load %arg7[%c0_73, %c128_74] : memref<8x256xf32, #tpu.memory_space<vmem>>, vector<8x128xf32>
    tpu.vector_store %arg7[%c0_73, %c128_74], %65 {strides = array<i32>} : memref<8x256xf32, #tpu.memory_space<vmem>>, vector<8x128xf32>,
    return
  }
}

</mosaic_0001>

<llo_original>
// kernel: tpu_custom_call.1
$region0: #{tpu_custom_call.1}
  #allocation0 [shape = 'u32[]', space=smem, size = 0x4, offset = 0x4, fixed_abs, tag = 'smem constant byte address 0x4 - core index']
  #allocation1 [shape = 'u32[144,128]{1,0:T(1,128)}', space=vmem, size = 0x12000, scoped, tag = 'internal scratch']
  %s0 = inlined_call_operand.hbm [shape: f32[4,128], index: 0, kind: input, shape index: {}]
  %s1 = inlined_call_operand.vmem [shape: f32[4,640], index: 1, kind: input, shape index: {}]
  %s2 = inlined_call_operand.vmem [shape: f32[2,4,256], index: 2, kind: input, shape index: {}]
  %s3 = inlined_call_operand.vmem [shape: f32[3,8,4], index: 3, kind: input, shape index: {}]
  %s4 = inlined_call_operand.vmem [shape: f32[3,8,8], index: 4, kind: input, shape index: {}]
  %s5 = inlined_call_operand.vmem [shape: f32[3,8,4], index: 5, kind: input, shape index: {}]
  %s6 = inlined_call_operand.vmem [shape: f32[1,384], index: 6, kind: input, shape index: {}]
  %s7 = inlined_call_operand.hbm [shape: f32[8,256], index: 7, kind: output, shape index: {}]
  %s8 = sld [smem:[#allocation0]]
  $region42: #{tpu_custom_call.1} parent=0
    _
  %s10 = ssub.s32 1, %s8
  %s11 = scalar_select 0, %s10, %s8
  $region1: #{tpu_custom_call.1} parent=0
    #allocation2 [shape = 'u8[2048]{0}', space=vmem, size = 0x800, scoped, tag = 'input window, operand 0, single buffered']
    #allocation3 [shape = 's32[1]{0}', space=sflag, size = 0x4, scoped, tag = 'scoped memory for tpu_custom_call.1']
    #allocation4 [shape = 's32[1]{0}', space=sflag, size = 0x4, scoped, tag = 'scoped memory for tpu_custom_call.1']
    #allocation5 [shape = 'u8[8192]{0}', space=vmem, size = 0x2000, scoped, tag = 'output window, operand 0, single buffered']
    %12 = vsyncpa [#allocation3], 0
    %13 = vsyncpa [#allocation4], 0
    // Predicated region
    $region2: #{tpu_custom_call.1} parent=1 // pred_check
      _
    $region3: #{tpu_custom_call.1} parent=1 // pred_check_branch
      %15 = sbr.rel (0) target = $region5
    $region4: #{tpu_custom_call.1} parent=1 // pred_region
      %s17 = ssub.s32 64, 64
      %18 = vsyncadd [#allocation3], %s17
      %s20 = sshll.u32 [#allocation2], 4
      %s21 = int_to_ptr.vmem [resolvable:$true] %s20
      %23 = dma.hbm_to_vmem [thread:$0]  %s0, 64, %s21, [#allocation3]
    $region5: #{tpu_custom_call.1} parent=1 // pred_fallthru
      _
    // Predicated region
    $region6: #{tpu_custom_call.1} parent=1 // pred_check
      _
    $region7: #{tpu_custom_call.1} parent=1 // pred_check_branch
      %25 = sbr.rel (0) target = $region9
    $region8: #{tpu_custom_call.1} parent=1 // pred_region
      _
    $region9: #{tpu_custom_call.1} parent=1 // pred_fallthru
      _
    // Predicated region
    $region10: #{tpu_custom_call.1} parent=1 // pred_check
      _
    $region11: #{tpu_custom_call.1} parent=1 // pred_check_branch
      %27 = sbr.rel (0) target = $region13
    $region12: #{tpu_custom_call.1} parent=1 // pred_region
      _
    $region13: #{tpu_custom_call.1} parent=1 // pred_fallthru
      _
    // Predicated region
    $region14: #{tpu_custom_call.1} parent=1 // pred_check
      _
    $region15: #{tpu_custom_call.1} parent=1 // pred_check_branch
      %29 = sbr.rel (0) target = $region17
    $region16: #{tpu_custom_call.1} parent=1 // pred_region
      _
    $region17: #{tpu_custom_call.1} parent=1 // pred_fallthru
      _
    // Predicated region
    $region18: #{tpu_custom_call.1} parent=1 // pred_check
      _
    $region19: #{tpu_custom_call.1} parent=1 // pred_check_branch
      %31 = sbr.rel (0) target = $region21
    $region20: #{tpu_custom_call.1} parent=1 // pred_region
      _
    $region21: #{tpu_custom_call.1} parent=1 // pred_fallthru
      _
    // Predicated region
    $region22: #{tpu_custom_call.1} parent=1 // pred_check
      _
    $region23: #{tpu_custom_call.1} parent=1 // pred_check_branch
      %33 = sbr.rel (0) target = $region25
    $region24: #{tpu_custom_call.1} parent=1 // pred_region
      _
    $region25: #{tpu_custom_call.1} parent=1 // pred_fallthru
      _
    // Predicated region
    $region26: #{tpu_custom_call.1} parent=1 // pred_check
      _
    $region27: #{tpu_custom_call.1} parent=1 // pred_check_branch
      %35 = sbr.rel (0) target = $region29
    $region28: #{tpu_custom_call.1} parent=1 // pred_region
      _
    $region29: #{tpu_custom_call.1} parent=1 // pred_fallthru
      _
    // Predicated region
    $region30: #{tpu_custom_call.1} parent=1 // pred_check
      _
    $region31: #{tpu_custom_call.1} parent=1 // pred_check_branch
      %37 = sbr.rel (0) target = $region33
    $region32: #{tpu_custom_call.1} parent=1 // pred_region
      %38 = dma.done [#allocation3], 64
    $region33: #{tpu_custom_call.1} parent=1 // pred_fallthru
      _
    %v39 = vld [vmem:[#allocation2] sm:$0xf]
    %v40 = vld [vmem:[%s3] sm:$0xff]
    %s41 = scalar_lea.vmem %s3, 8
    %v42 = vld [vmem:[%s41] sm:$0xff]
    %44 = vrot.lane.b32.xlu0 %v39, 126
    %v45 = vpop.permute.xlu0 %44
    %vm46 = vcmask 31744
    %v48 = vsel %vm46, %v42, 0
    %vm50 = vcmask 1043456
    %v51 = vsel %vm50, %v45, 0
    %53 = vmatprep.subr.mxu0 0.0
    %54 = vmatpush1.msra.mxu0 %v51
    %55 = vmatprep.subr.mxu0 0.0
    %56 = vmatpush1.msra.mxu0 0.0
    %57 = vmatprep.subr.mxu0 0.0
    %58 = vmatpush1.msra.mxu0 0.0
    %59 = vmatprep.subr.mxu0 0.0
    %60 = vmatpush1.msra.mxu0 0.0
    %61 = vmatprep.subr.mxu0 0.0
    %62 = vmatpush1.msra.mxu0 0.0
    %63 = vmatprep.subr.mxu0 0.0
    %64 = vmatpush1.msra.mxu0 0.0
    %65 = vmatprep.subr.mxu0 0.0
    %66 = vmatpush1.msra.mxu0 0.0
    %67 = vmatprep.subr.mxu0 0.0
    %68 = vmatpush1.msra.mxu0 0.0
    %69 = vmatprep.subr.mxu0 0.0
    %70 = vmatpush1.msra.mxu0 0.0
    %71 = vmatprep.subr.mxu0 0.0
    %72 = vmatpush1.msra.mxu0 0.0
    %73 = vmatprep.subr.mxu0 0.0
    %74 = vmatpush1.msra.mxu0 0.0
    %75 = vmatprep.subr.mxu0 0.0
    %76 = vmatpush1.msra.mxu0 0.0
    %77 = vmatprep.subr.mxu0 0.0
    %78 = vmatpush1.msra.mxu0 0.0
    %79 = vmatprep.subr.mxu0 0.0
    %80 = vmatpush1.msra.mxu0 0.0
    %81 = vmatprep.subr.mxu0 0.0
    %82 = vmatpush1.msra.mxu0 0.0
    %83 = vmatprep.subr.mxu0 0.0
    %84 = vmatpush1.msra.mxu0 0.0
    %85 = vmatprep.subr.mxu0 0.0
    %86 = vmatpush1.msra.mxu0 0.0
    %87 = vmatprep.subr.mxu0 0.0
    %88 = vmatpush1.msra.mxu0 0.0
    %89 = vmatprep.subr.mxu0 0.0
    %90 = vmatpush1.msra.mxu0 0.0
    %91 = vmatprep.subr.mxu0 0.0
    %92 = vmatpush1.msra.mxu0 0.0
    %93 = vmatprep.subr.mxu0 0.0
    %94 = vmatpush1.msra.mxu0 0.0
    %95 = vmatprep.subr.mxu0 0.0
    %96 = vmatpush1.msra.mxu0 0.0
    %97 = vmatprep.subr.mxu0 0.0
    %98 = vmatpush1.msra.mxu0 0.0
    %99 = vmatprep.subr.mxu0 0.0
    %100 = vmatpush1.msra.mxu0 0.0
    %101 = vmatprep.subr.mxu0 0.0
    %102 = vmatpush1.msra.mxu0 0.0
    %103 = vmatprep.subr.mxu0 0.0
    %104 = vmatpush1.msra.mxu0 0.0
    %105 = vmatprep.subr.mxu0 0.0
    %106 = vmatpush1.msra.mxu0 0.0
    %107 = vmatprep.subr.mxu0 0.0
    %108 = vmatpush1.msra.mxu0 0.0
    %109 = vmatprep.subr.mxu0 0.0
    %110 = vmatpush1.msra.mxu0 0.0
    %111 = vmatprep.subr.mxu0 0.0
    %112 = vmatpush1.msra.mxu0 0.0
    %113 = vmatprep.subr.mxu0 0.0
    %114 = vmatpush1.msra.mxu0 0.0
    %115 = vmatprep.subr.mxu0 0.0
    %116 = vmatpush1.msra.mxu0 0.0
    %117 = vmatprep.mubr.f32.mxu0 0.0
    %118 = vmatmul.mubr.f32.gmra.mrb[0].mxu0 %v48
    %v119 = vpop.f32.mrb[0].mxu0
    %v120 = vadd.f32 0.0, %v119
    %v121 = vpop.f32.mrb[0].mxu0
    %122 = vdwg.mxu0
    %v124 = vsel %vm46, %v40, 0
    %v126 = vsel %vm50, %v39, 0
    %128 = vmatprep.subr.mxu0 0.0
    %129 = vmatpush1.msra.mxu0 %v126
    %130 = vmatprep.subr.mxu0 0.0
    %131 = vmatpush1.msra.mxu0 0.0
    %132 = vmatprep.subr.mxu0 0.0
    %133 = vmatpush1.msra.mxu0 0.0
    %134 = vmatprep.subr.mxu0 0.0
    %135 = vmatpush1.msra.mxu0 0.0
    %136 = vmatprep.subr.mxu0 0.0
    %137 = vmatpush1.msra.mxu0 0.0
    %138 = vmatprep.subr.mxu0 0.0
    %139 = vmatpush1.msra.mxu0 0.0
    %140 = vmatprep.subr.mxu0 0.0
    %141 = vmatpush1.msra.mxu0 0.0
    %142 = vmatprep.subr.mxu0 0.0
    %143 = vmatpush1.msra.mxu0 0.0
    %144 = vmatprep.subr.mxu0 0.0
    %145 = vmatpush1.msra.mxu0 0.0
    %146 = vmatprep.subr.mxu0 0.0
    %147 = vmatpush1.msra.mxu0 0.0
    %148 = vmatprep.subr.mxu0 0.0
    %149 = vmatpush1.msra.mxu0 0.0
    %150 = vmatprep.subr.mxu0 0.0
    %151 = vmatpush1.msra.mxu0 0.0
    %152 = vmatprep.subr.mxu0 0.0
    %153 = vmatpush1.msra.mxu0 0.0
    %154 = vmatprep.subr.mxu0 0.0
    %155 = vmatpush1.msra.mxu0 0.0
    %156 = vmatprep.subr.mxu0 0.0
    %157 = vmatpush1.msra.mxu0 0.0
    %158 = vmatprep.subr.mxu0 0.0
    %159 = vmatpush1.msra.mxu0 0.0
    %160 = vmatprep.subr.mxu0 0.0
    %161 = vmatpush1.msra.mxu0 0.0
    %162 = vmatprep.subr.mxu0 0.0
    %163 = vmatpush1.msra.mxu0 0.0
    %164 = vmatprep.subr.mxu0 0.0
    %165 = vmatpush1.msra.mxu0 0.0
    %166 = vmatprep.subr.mxu0 0.0
    %167 = vmatpush1.msra.mxu0 0.0
    %168 = vmatprep.subr.mxu0 0.0
    %169 = vmatpush1.msra.mxu0 0.0
    %170 = vmatprep.subr.mxu0 0.0
    %171 = vmatpush1.msra.mxu0 0.0
    %172 = vmatprep.subr.mxu0 0.0
    %173 = vmatpush1.msra.mxu0 0.0
    %174 = vmatprep.subr.mxu0 0.0
    %175 = vmatpush1.msra.mxu0 0.0
    %176 = vmatprep.subr.mxu0 0.0
    %177 = vmatpush1.msra.mxu0 0.0
    %178 = vmatprep.subr.mxu0 0.0
    %179 = vmatpush1.msra.mxu0 0.0
    %180 = vmatprep.subr.mxu0 0.0
    %181 = vmatpush1.msra.mxu0 0.0
    %182 = vmatprep.subr.mxu0 0.0
    %183 = vmatpush1.msra.mxu0 0.0
    %184 = vmatprep.subr.mxu0 0.0
    %185 = vmatpush1.msra.mxu0 0.0
    %186 = vmatprep.subr.mxu0 0.0
    %187 = vmatpush1.msra.mxu0 0.0
    %188 = vmatprep.subr.mxu0 0.0
    %189 = vmatpush1.msra.mxu0 0.0
    %190 = vmatprep.subr.mxu0 0.0
    %191 = vmatpush1.msra.mxu0 0.0
    %192 = vmatprep.mubr.f32.mxu0 0.0
    %193 = vmatmul.mubr.f32.gmra.mrb[0].mxu0 %v124
    %v194 = vpop.f32.mrb[0].mxu0
    %v195 = vadd.f32 %v120, %v194
    %v196 = vpop.f32.mrb[0].mxu0
    %197 = vdwg.mxu0
    %s198 = scalar_lea.vmem %s3, 16
    %v199 = vld [vmem:[%s198] sm:$0xff]
    %200 = vrot.lane.b32.xlu0 %v39, 124
    %v201 = vpop.permute.xlu0 %200
    %v203 = vsel %vm46, %v199, 0
    %v205 = vsel %vm50, %v201, 0
    %207 = vmatprep.subr.mxu0 0.0
    %208 = vmatpush1.msra.mxu0 %v205
    %209 = vmatprep.subr.mxu0 0.0
    %210 = vmatpush1.msra.mxu0 0.0
    %211 = vmatprep.subr.mxu0 0.0
    %212 = vmatpush1.msra.mxu0 0.0
    %213 = vmatprep.subr.mxu0 0.0
    %214 = vmatpush1.msra.mxu0 0.0
    %215 = vmatprep.subr.mxu0 0.0
    %216 = vmatpush1.msra.mxu0 0.0
    %217 = vmatprep.subr.mxu0 0.0
    %218 = vmatpush1.msra.mxu0 0.0
    %219 = vmatprep.subr.mxu0 0.0
    %220 = vmatpush1.msra.mxu0 0.0
    %221 = vmatprep.subr.mxu0 0.0
    %222 = vmatpush1.msra.mxu0 0.0
    %223 = vmatprep.subr.mxu0 0.0
    %224 = vmatpush1.msra.mxu0 0.0
    %225 = vmatprep.subr.mxu0 0.0
    %226 = vmatpush1.msra.mxu0 0.0
    %227 = vmatprep.subr.mxu0 0.0
    %228 = vmatpush1.msra.mxu0 0.0
    %229 = vmatprep.subr.mxu0 0.0
    %230 = vmatpush1.msra.mxu0 0.0
    %231 = vmatprep.subr.mxu0 0.0
    %232 = vmatpush1.msra.mxu0 0.0
    %233 = vmatprep.subr.mxu0 0.0
    %234 = vmatpush1.msra.mxu0 0.0
    %235 = vmatprep.subr.mxu0 0.0
    %236 = vmatpush1.msra.mxu0 0.0
    %237 = vmatprep.subr.mxu0 0.0
    %238 = vmatpush1.msra.mxu0 0.0
    %239 = vmatprep.subr.mxu0 0.0
    %240 = vmatpush1.msra.mxu0 0.0
    %241 = vmatprep.subr.mxu0 0.0
    %242 = vmatpush1.msra.mxu0 0.0
    %243 = vmatprep.subr.mxu0 0.0
    %244 = vmatpush1.msra.mxu0 0.0
    %245 = vmatprep.subr.mxu0 0.0
    %246 = vmatpush1.msra.mxu0 0.0
    %247 = vmatprep.subr.mxu0 0.0
    %248 = vmatpush1.msra.mxu0 0.0
    %249 = vmatprep.subr.mxu0 0.0
    %250 = vmatpush1.msra.mxu0 0.0
    %251 = vmatprep.subr.mxu0 0.0
    %252 = vmatpush1.msra.mxu0 0.0
    %253 = vmatprep.subr.mxu0 0.0
    %254 = vmatpush1.msra.mxu0 0.0
    %255 = vmatprep.subr.mxu0 0.0
    %256 = vmatpush1.msra.mxu0 0.0
    %257 = vmatprep.subr.mxu0 0.0
    %258 = vmatpush1.msra.mxu0 0.0
    %259 = vmatprep.subr.mxu0 0.0
    %260 = vmatpush1.msra.mxu0 0.0
    %261 = vmatprep.subr.mxu0 0.0
    %262 = vmatpush1.msra.mxu0 0.0
    %263 = vmatprep.subr.mxu0 0.0
    %264 = vmatpush1.msra.mxu0 0.0
    %265 = vmatprep.subr.mxu0 0.0
    %266 = vmatpush1.msra.mxu0 0.0
    %267 = vmatprep.subr.mxu0 0.0
    %268 = vmatpush1.msra.mxu0 0.0
    %269 = vmatprep.subr.mxu0 0.0
    %270 = vmatpush1.msra.mxu0 0.0
    %271 = vmatprep.mubr.f32.mxu0 0.0
    %272 = vmatmul.mubr.f32.gmra.mrb[0].mxu0 %v203
    %v273 = vpop.f32.mrb[0].mxu0
    %v274 = vadd.f32 0.0, %v273
    %v275 = vpop.f32.mrb[0].mxu0
    %276 = vdwg.mxu0
    %v277 = vadd.f32 %v195, %v274
    %vm278 = vcmask 261120
    %v279 = vsel %vm278, %v277, 0.0
    %280 = vadd.xlane.f32.xlu0 %v279
    %v281 = vpop.xlane.xlu0 %280
    %v282 = vmul.f32 %v281, 0.03125
    %v283 = vsub.f32 %v277, %v282
    %v284 = vmul.f32 %v283, %v283
    %v285 = vsel %vm278, %v284, 0.0
    %286 = vadd.xlane.f32.xlu0 %v285
    %v287 = vpop.xlane.xlu0 %286
    %v288 = vmul.f32 %v287, 0.03125
    %v289 = vadd.f32 %v288, 1e-05
    %v290 = vrsqrt.pop %v289
    %v291 = vld [vmem:[%s1] sm:$0xff]
    %v292 = vld [vmem:[%s1 + $0x8] sm:$0xf]
    %v293 = vld [vmem:[%s1 + $0x4] sm:$0xff]
    %v294 = vld [vmem:[%s1 + $0xc] sm:$0xf]
    %v297 = vcombine.high %v293, %v293
    %v298 = vsel %vm50, %v293, 0
    %v300 = vsel %vm50, %v297, 0
    %v302 = vsel %vm50, %v294, 0
    %304 = vmatprep.subr.mxu0 %v300
    %305 = vmatpush1.msra.mxu0 %v298
    %306 = vmatprep.subr.mxu0 0.0
    %307 = vmatpush1.msra.mxu0 0.0
    %308 = vmatprep.subr.mxu0 0.0
    %309 = vmatpush1.msra.mxu0 0.0
    %310 = vmatprep.subr.mxu0 0.0
    %311 = vmatpush1.msra.mxu0 0.0
    %312 = vmatprep.subr.mxu0 0.0
    %313 = vmatpush1.msra.mxu0 0.0
    %314 = vmatprep.subr.mxu0 0.0
    %315 = vmatpush1.msra.mxu0 0.0
    %316 = vmatprep.subr.mxu0 0.0
    %317 = vmatpush1.msra.mxu0 0.0
    %318 = vmatprep.subr.mxu0 0.0
    %319 = vmatpush1.msra.mxu0 0.0
    %320 = vmatprep.subr.mxu0 0.0
    %321 = vmatpush1.msra.mxu0 0.0
    %322 = vmatprep.subr.mxu0 0.0
    %323 = vmatpush1.msra.mxu0 0.0
    %324 = vmatprep.subr.mxu0 0.0
    %325 = vmatpush1.msra.mxu0 0.0
    %326 = vmatprep.subr.mxu0 0.0
    %327 = vmatpush1.msra.mxu0 0.0
    %328 = vmatprep.subr.mxu0 0.0
    %329 = vmatpush1.msra.mxu0 0.0
    %330 = vmatprep.subr.mxu0 0.0
    %331 = vmatpush1.msra.mxu0 0.0
    %332 = vmatprep.subr.mxu0 0.0
    %333 = vmatpush1.msra.mxu0 0.0
    %334 = vmatprep.subr.mxu0 0.0
    %335 = vmatpush1.msra.mxu0 0.0
    %336 = vmatprep.subr.mxu0 0.0
    %337 = vmatpush1.msra.mxu0 0.0
    %338 = vmatprep.subr.mxu0 0.0
    %339 = vmatpush1.msra.mxu0 0.0
    %340 = vmatprep.subr.mxu0 0.0
    %341 = vmatpush1.msra.mxu0 0.0
    %342 = vmatprep.subr.mxu0 0.0
    %343 = vmatpush1.msra.mxu0 0.0
    %344 = vmatprep.subr.mxu0 0.0
    %345 = vmatpush1.msra.mxu0 0.0
    %346 = vmatprep.subr.mxu0 0.0
    %347 = vmatpush1.msra.mxu0 0.0
    %348 = vmatprep.subr.mxu0 0.0
    %349 = vmatpush1.msra.mxu0 0.0
    %350 = vmatprep.subr.mxu0 0.0
    %351 = vmatpush1.msra.mxu0 0.0
    %352 = vmatprep.subr.mxu0 0.0
    %353 = vmatpush1.msra.mxu0 0.0
    %354 = vmatprep.subr.mxu0 0.0
    %355 = vmatpush1.msra.mxu0 0.0
    %356 = vmatprep.subr.mxu0 0.0
    %357 = vmatpush1.msra.mxu0 0.0
    %358 = vmatprep.subr.mxu0 0.0
    %359 = vmatpush1.msra.mxu0 0.0
    %360 = vmatprep.subr.mxu0 0.0
    %361 = vmatpush1.msra.mxu0 0.0
    %362 = vmatprep.subr.mxu0 0.0
    %363 = vmatpush1.msra.mxu0 0.0
    %364 = vmatprep.subr.mxu0 0.0
    %365 = vmatpush1.msra.mxu0 0.0
    %366 = vmatprep.subr.mxu0 0.0
    %367 = vmatpush1.msra.mxu0 0.0
    %368 = vmatprep.mubr.f32.mxu0 0.0
    %369 = vmatmul.mubr.f32.gmra.mrb[0].mxu0 %v48
    %v370 = vpop.f32.mrb[0].mxu0
    %v371 = vadd.f32 0.0, %v370
    %v372 = vpop.f32.mrb[0].mxu0
    %v373 = vadd.f32 0.0, %v372
    %374 = vdwg.mxu0
    %375 = vmatprep.subr.mxu0 0.0
    %376 = vmatpush1.msra.mxu0 %v302
    %377 = vmatprep.subr.mxu0 0.0
    %378 = vmatpush1.msra.mxu0 0.0
    %379 = vmatprep.subr.mxu0 0.0
    %380 = vmatpush1.msra.mxu0 0.0
    %381 = vmatprep.subr.mxu0 0.0
    %382 = vmatpush1.msra.mxu0 0.0
    %383 = vmatprep.subr.mxu0 0.0
    %384 = vmatpush1.msra.mxu0 0.0
    %385 = vmatprep.subr.mxu0 0.0
    %386 = vmatpush1.msra.mxu0 0.0
    %387 = vmatprep.subr.mxu0 0.0
    %388 = vmatpush1.msra.mxu0 0.0
    %389 = vmatprep.subr.mxu0 0.0
    %390 = vmatpush1.msra.mxu0 0.0
    %391 = vmatprep.subr.mxu0 0.0
    %392 = vmatpush1.msra.mxu0 0.0
    %393 = vmatprep.subr.mxu0 0.0
    %394 = vmatpush1.msra.mxu0 0.0
    %395 = vmatprep.subr.mxu0 0.0
    %396 = vmatpush1.msra.mxu0 0.0
    %397 = vmatprep.subr.mxu0 0.0
    %398 = vmatpush1.msra.mxu0 0.0
    %399 = vmatprep.subr.mxu0 0.0
    %400 = vmatpush1.msra.mxu0 0.0
    %401 = vmatprep.subr.mxu0 0.0
    %402 = vmatpush1.msra.mxu0 0.0
    %403 = vmatprep.subr.mxu0 0.0
    %404 = vmatpush1.msra.mxu0 0.0
    %405 = vmatprep.subr.mxu0 0.0
    %406 = vmatpush1.msra.mxu0 0.0
    %407 = vmatprep.subr.mxu0 0.0
    %408 = vmatpush1.msra.mxu0 0.0
    %409 = vmatprep.subr.mxu0 0.0
    %410 = vmatpush1.msra.mxu0 0.0
    %411 = vmatprep.subr.mxu0 0.0
    %412 = vmatpush1.msra.mxu0 0.0
    %413 = vmatprep.subr.mxu0 0.0
    %414 = vmatpush1.msra.mxu0 0.0
    %415 = vmatprep.subr.mxu0 0.0
    %416 = vmatpush1.msra.mxu0 0.0
    %417 = vmatprep.subr.mxu0 0.0
    %418 = vmatpush1.msra.mxu0 0.0
    %419 = vmatprep.subr.mxu0 0.0
    %420 = vmatpush1.msra.mxu0 0.0
    %421 = vmatprep.subr.mxu0 0.0
    %422 = vmatpush1.msra.mxu0 0.0
    %423 = vmatprep.subr.mxu0 0.0
    %424 = vmatpush1.msra.mxu0 0.0
    %425 = vmatprep.subr.mxu0 0.0
    %426 = vmatpush1.msra.mxu0 0.0
    %427 = vmatprep.subr.mxu0 0.0
    %428 = vmatpush1.msra.mxu0 0.0
    %429 = vmatprep.subr.mxu0 0.0
    %430 = vmatpush1.msra.mxu0 0.0
    %431 = vmatprep.subr.mxu0 0.0
    %432 = vmatpush1.msra.mxu0 0.0
    %433 = vmatprep.subr.mxu0 0.0
    %434 = vmatpush1.msra.mxu0 0.0
    %435 = vmatprep.subr.mxu0 0.0
    %436 = vmatpush1.msra.mxu0 0.0
    %437 = vmatprep.subr.mxu0 0.0
    %438 = vmatpush1.msra.mxu0 0.0
    %439 = vmatprep.mubr.f32.mxu0 0.0
    %440 = vmatmul.mubr.f32.gmra.mrb[0].mxu0 %v48
    %v441 = vpop.f32.mrb[0].mxu0
    %v442 = vadd.f32 0.0, %v441
    %v443 = vpop.f32.mrb[0].mxu0
    %444 = vdwg.mxu0
    %v447 = vcombine.high %v291, %v291
    %v448 = vsel %vm50, %v291, 0
    %v450 = vsel %vm50, %v447, 0
    %v452 = vsel %vm50, %v292, 0
    %454 = vmatprep.subr.mxu0 %v450
    %455 = vmatpush1.msra.mxu0 %v448
    %456 = vmatprep.subr.mxu0 0.0
    %457 = vmatpush1.msra.mxu0 0.0
    %458 = vmatprep.subr.mxu0 0.0
    %459 = vmatpush1.msra.mxu0 0.0
    %460 = vmatprep.subr.mxu0 0.0
    %461 = vmatpush1.msra.mxu0 0.0
    %462 = vmatprep.subr.mxu0 0.0
    %463 = vmatpush1.msra.mxu0 0.0
    %464 = vmatprep.subr.mxu0 0.0
    %465 = vmatpush1.msra.mxu0 0.0
    %466 = vmatprep.subr.mxu0 0.0
    %467 = vmatpush1.msra.mxu0 0.0
    %468 = vmatprep.subr.mxu0 0.0
    %469 = vmatpush1.msra.mxu0 0.0
    %470 = vmatprep.subr.mxu0 0.0
    %471 = vmatpush1.msra.mxu0 0.0
    %472 = vmatprep.subr.mxu0 0.0
    %473 = vmatpush1.msra.mxu0 0.0
    %474 = vmatprep.subr.mxu0 0.0
    %475 = vmatpush1.msra.mxu0 0.0
    %476 = vmatprep.subr.mxu0 0.0
    %477 = vmatpush1.msra.mxu0 0.0
    %478 = vmatprep.subr.mxu0 0.0
    %479 = vmatpush1.msra.mxu0 0.0
    %480 = vmatprep.subr.mxu0 0.0
    %481 = vmatpush1.msra.mxu0 0.0
    %482 = vmatprep.subr.mxu0 0.0
    %483 = vmatpush1.msra.mxu0 0.0
    %484 = vmatprep.subr.mxu0 0.0
    %485 = vmatpush1.msra.mxu0 0.0
    %486 = vmatprep.subr.mxu0 0.0
    %487 = vmatpush1.msra.mxu0 0.0
    %488 = vmatprep.subr.mxu0 0.0
    %489 = vmatpush1.msra.mxu0 0.0
    %490 = vmatprep.subr.mxu0 0.0
    %491 = vmatpush1.msra.mxu0 0.0
    %492 = vmatprep.subr.mxu0 0.0
    %493 = vmatpush1.msra.mxu0 0.0
    %494 = vmatprep.subr.mxu0 0.0
    %495 = vmatpush1.msra.mxu0 0.0
    %496 = vmatprep.subr.mxu0 0.0
    %497 = vmatpush1.msra.mxu0 0.0
    %498 = vmatprep.subr.mxu0 0.0
    %499 = vmatpush1.msra.mxu0 0.0
    %500 = vmatprep.subr.mxu0 0.0
    %501 = vmatpush1.msra.mxu0 0.0
    %502 = vmatprep.subr.mxu0 0.0
    %503 = vmatpush1.msra.mxu0 0.0
    %504 = vmatprep.subr.mxu0 0.0
    %505 = vmatpush1.msra.mxu0 0.0
    %506 = vmatprep.subr.mxu0 0.0
    %507 = vmatpush1.msra.mxu0 0.0
    %508 = vmatprep.subr.mxu0 0.0
    %509 = vmatpush1.msra.mxu0 0.0
    %510 = vmatprep.subr.mxu0 0.0
    %511 = vmatpush1.msra.mxu0 0.0
    %512 = vmatprep.subr.mxu0 0.0
    %513 = vmatpush1.msra.mxu0 0.0
    %514 = vmatprep.subr.mxu0 0.0
    %515 = vmatpush1.msra.mxu0 0.0
    %516 = vmatprep.subr.mxu0 0.0
    %517 = vmatpush1.msra.mxu0 0.0
    %518 = vmatprep.mubr.f32.mxu0 0.0
    %519 = vmatmul.mubr.f32.gmra.mrb[0].mxu0 %v124
    %v520 = vpop.f32.mrb[0].mxu0
    %v521 = vadd.f32 %v371, %v520
    %v522 = vpop.f32.mrb[0].mxu0
    %v523 = vadd.f32 %v373, %v522
    %524 = vdwg.mxu0
    %525 = vmatprep.subr.mxu0 0.0
    %526 = vmatpush1.msra.mxu0 %v452
    %527 = vmatprep.subr.mxu0 0.0
    %528 = vmatpush1.msra.mxu0 0.0
    %529 = vmatprep.subr.mxu0 0.0
    %530 = vmatpush1.msra.mxu0 0.0
    %531 = vmatprep.subr.mxu0 0.0
    %532 = vmatpush1.msra.mxu0 0.0
    %533 = vmatprep.subr.mxu0 0.0
    %534 = vmatpush1.msra.mxu0 0.0
    %535 = vmatprep.subr.mxu0 0.0
    %536 = vmatpush1.msra.mxu0 0.0
    %537 = vmatprep.subr.mxu0 0.0
    %538 = vmatpush1.msra.mxu0 0.0
    %539 = vmatprep.subr.mxu0 0.0
    %540 = vmatpush1.msra.mxu0 0.0
    %541 = vmatprep.subr.mxu0 0.0
    %542 = vmatpush1.msra.mxu0 0.0
    %543 = vmatprep.subr.mxu0 0.0
    %544 = vmatpush1.msra.mxu0 0.0
    %545 = vmatprep.subr.mxu0 0.0
    %546 = vmatpush1.msra.mxu0 0.0
    %547 = vmatprep.subr.mxu0 0.0
    %548 = vmatpush1.msra.mxu0 0.0
    %549 = vmatprep.subr.mxu0 0.0
    %550 = vmatpush1.msra.mxu0 0.0
    %551 = vmatprep.subr.mxu0 0.0
    %552 = vmatpush1.msra.mxu0 0.0
    %553 = vmatprep.subr.mxu0 0.0
    %554 = vmatpush1.msra.mxu0 0.0
    %555 = vmatprep.subr.mxu0 0.0
    %556 = vmatpush1.msra.mxu0 0.0
    %557 = vmatprep.subr.mxu0 0.0
    %558 = vmatpush1.msra.mxu0 0.0
    %559 = vmatprep.subr.mxu0 0.0
    %560 = vmatpush1.msra.mxu0 0.0
    %561 = vmatprep.subr.mxu0 0.0
    %562 = vmatpush1.msra.mxu0 0.0
    %563 = vmatprep.subr.mxu0 0.0
    %564 = vmatpush1.msra.mxu0 0.0
    %565 = vmatprep.subr.mxu0 0.0
    %566 = vmatpush1.msra.mxu0 0.0
    %567 = vmatprep.subr.mxu0 0.0
    %568 = vmatpush1.msra.mxu0 0.0
    %569 = vmatprep.subr.mxu0 0.0
    %570 = vmatpush1.msra.mxu0 0.0
    %571 = vmatprep.subr.mxu0 0.0
    %572 = vmatpush1.msra.mxu0 0.0
    %573 = vmatprep.subr.mxu0 0.0
    %574 = vmatpush1.msra.mxu0 0.0
    %575 = vmatprep.subr.mxu0 0.0
    %576 = vmatpush1.msra.mxu0 0.0
    %577 = vmatprep.subr.mxu0 0.0
    %578 = vmatpush1.msra.mxu0 0.0
    %579 = vmatprep.subr.mxu0 0.0
    %580 = vmatpush1.msra.mxu0 0.0
    %581 = vmatprep.subr.mxu0 0.0
    %582 = vmatpush1.msra.mxu0 0.0
    %583 = vmatprep.subr.mxu0 0.0
    %584 = vmatpush1.msra.mxu0 0.0
    %585 = vmatprep.subr.mxu0 0.0
    %586 = vmatpush1.msra.mxu0 0.0
    %587 = vmatprep.subr.mxu0 0.0
    %588 = vmatpush1.msra.mxu0 0.0
    %589 = vmatprep.mubr.f32.mxu0 0.0
    %590 = vmatmul.mubr.f32.gmra.mrb[0].mxu0 %v124
    %v591 = vpop.f32.mrb[0].mxu0
    %v592 = vadd.f32 %v442, %v591
    %v593 = vpop.f32.mrb[0].mxu0
    %594 = vdwg.mxu0
    %v595 = vld [vmem:[%s1 + $0x8] sm:$0xff]
    %v596 = vld [vmem:[%s1 + $0x10] sm:$0xf]
    %v599 = vcombine.high %v595, %v595
    %v600 = vsel %vm50, %v595, 0
    %v602 = vsel %vm50, %v599, 0
    %v604 = vsel %vm50, %v596, 0
    %606 = vmatprep.subr.mxu0 %v602
    %607 = vmatpush1.msra.mxu0 %v600
    %608 = vmatprep.subr.mxu0 0.0
    %609 = vmatpush1.msra.mxu0 0.0
    %610 = vmatprep.subr.mxu0 0.0
    %611 = vmatpush1.msra.mxu0 0.0
    %612 = vmatprep.subr.mxu0 0.0
    %613 = vmatpush1.msra.mxu0 0.0
    %614 = vmatprep.subr.mxu0 0.0
    %615 = vmatpush1.msra.mxu0 0.0
    %616 = vmatprep.subr.mxu0 0.0
    %617 = vmatpush1.msra.mxu0 0.0
    %618 = vmatprep.subr.mxu0 0.0
    %619 = vmatpush1.msra.mxu0 0.0
    %620 = vmatprep.subr.mxu0 0.0
    %621 = vmatpush1.msra.mxu0 0.0
    %622 = vmatprep.subr.mxu0 0.0
    %623 = vmatpush1.msra.mxu0 0.0
    %624 = vmatprep.subr.mxu0 0.0
    %625 = vmatpush1.msra.mxu0 0.0
    %626 = vmatprep.subr.mxu0 0.0
    %627 = vmatpush1.msra.mxu0 0.0
    %628 = vmatprep.subr.mxu0 0.0
    %629 = vmatpush1.msra.mxu0 0.0
    %630 = vmatprep.subr.mxu0 0.0
    %631 = vmatpush1.msra.mxu0 0.0
    %632 = vmatprep.subr.mxu0 0.0
    %633 = vmatpush1.msra.mxu0 0.0
    %634 = vmatprep.subr.mxu0 0.0
    %635 = vmatpush1.msra.mxu0 0.0
    %636 = vmatprep.subr.mxu0 0.0
    %637 = vmatpush1.msra.mxu0 0.0
    %638 = vmatprep.subr.mxu0 0.0
    %639 = vmatpush1.msra.mxu0 0.0
    %640 = vmatprep.subr.mxu0 0.0
    %641 = vmatpush1.msra.mxu0 0.0
    %642 = vmatprep.subr.mxu0 0.0
    %643 = vmatpush1.msra.mxu0 0.0
    %644 = vmatprep.subr.mxu0 0.0
    %645 = vmatpush1.msra.mxu0 0.0
    %646 = vmatprep.subr.mxu0 0.0
    %647 = vmatpush1.msra.mxu0 0.0
    %648 = vmatprep.subr.mxu0 0.0
    %649 = vmatpush1.msra.mxu0 0.0
    %650 = vmatprep.subr.mxu0 0.0
    %651 = vmatpush1.msra.mxu0 0.0
    %652 = vmatprep.subr.mxu0 0.0
    %653 = vmatpush1.msra.mxu0 0.0
    %654 = vmatprep.subr.mxu0 0.0
    %655 = vmatpush1.msra.mxu0 0.0
    %656 = vmatprep.subr.mxu0 0.0
    %657 = vmatpush1.msra.mxu0 0.0
    %658 = vmatprep.subr.mxu0 0.0
    %659 = vmatpush1.msra.mxu0 0.0
    %660 = vmatprep.subr.mxu0 0.0
    %661 = vmatpush1.msra.mxu0 0.0
    %662 = vmatprep.subr.mxu0 0.0
    %663 = vmatpush1.msra.mxu0 0.0
    %664 = vmatprep.subr.mxu0 0.0
    %665 = vmatpush1.msra.mxu0 0.0
    %666 = vmatprep.subr.mxu0 0.0
    %667 = vmatpush1.msra.mxu0 0.0
    %668 = vmatprep.subr.mxu0 0.0
    %669 = vmatpush1.msra.mxu0 0.0
    %670 = vmatprep.mubr.f32.mxu0 0.0
    %671 = vmatmul.mubr.f32.gmra.mrb[0].mxu0 %v203
    %v672 = vpop.f32.mrb[0].mxu0
    %v673 = vadd.f32 0.0, %v672
    %v674 = vpop.f32.mrb[0].mxu0
    %v675 = vadd.f32 0.0, %v674
    %676 = vdwg.mxu0
    %677 = vmatprep.subr.mxu0 0.0
    %678 = vmatpush1.msra.mxu0 %v604
    %679 = vmatprep.subr.mxu0 0.0
    %680 = vmatpush1.msra.mxu0 0.0
    %681 = vmatprep.subr.mxu0 0.0
    %682 = vmatpush1.msra.mxu0 0.0
    %683 = vmatprep.subr.mxu0 0.0
    %684 = vmatpush1.msra.mxu0 0.0
    %685 = vmatprep.subr.mxu0 0.0
    %686 = vmatpush1.msra.mxu0 0.0
    %687 = vmatprep.subr.mxu0 0.0
    %688 = vmatpush1.msra.mxu0 0.0
    %689 = vmatprep.subr.mxu0 0.0
    %690 = vmatpush1.msra.mxu0 0.0
    %691 = vmatprep.subr.mxu0 0.0
    %692 = vmatpush1.msra.mxu0 0.0
    %693 = vmatprep.subr.mxu0 0.0
    %694 = vmatpush1.msra.mxu0 0.0
    %695 = vmatprep.subr.mxu0 0.0
    %696 = vmatpush1.msra.mxu0 0.0
    %697 = vmatprep.subr.mxu0 0.0
    %698 = vmatpush1.msra.mxu0 0.0
    %699 = vmatprep.subr.mxu0 0.0
    %700 = vmatpush1.msra.mxu0 0.0
    %701 = vmatprep.subr.mxu0 0.0
    %702 = vmatpush1.msra.mxu0 0.0
    %703 = vmatprep.subr.mxu0 0.0
    %704 = vmatpush1.msra.mxu0 0.0
    %705 = vmatprep.subr.mxu0 0.0
    %706 = vmatpush1.msra.mxu0 0.0
    %707 = vmatprep.subr.mxu0 0.0
    %708 = vmatpush1.msra.mxu0 0.0
    %709 = vmatprep.subr.mxu0 0.0
    %710 = vmatpush1.msra.mxu0 0.0
    %711 = vmatprep.subr.mxu0 0.0
    %712 = vmatpush1.msra.mxu0 0.0
    %713 = vmatprep.subr.mxu0 0.0
    %714 = vmatpush1.msra.mxu0 0.0
    %715 = vmatprep.subr.mxu0 0.0
    %716 = vmatpush1.msra.mxu0 0.0
    %717 = vmatprep.subr.mxu0 0.0
    %718 = vmatpush1.msra.mxu0 0.0
    %719 = vmatprep.subr.mxu0 0.0
    %720 = vmatpush1.msra.mxu0 0.0
    %721 = vmatprep.subr.mxu0 0.0
    %722 = vmatpush1.msra.mxu0 0.0
    %723 = vmatprep.subr.mxu0 0.0
    %724 = vmatpush1.msra.mxu0 0.0
    %725 = vmatprep.subr.mxu0 0.0
    %726 = vmatpush1.msra.mxu0 0.0
    %727 = vmatprep.subr.mxu0 0.0
    %728 = vmatpush1.msra.mxu0 0.0
    %729 = vmatprep.subr.mxu0 0.0
    %730 = vmatpush1.msra.mxu0 0.0
    %731 = vmatprep.subr.mxu0 0.0
    %732 = vmatpush1.msra.mxu0 0.0
    %733 = vmatprep.subr.mxu0 0.0
    %734 = vmatpush1.msra.mxu0 0.0
    %735 = vmatprep.subr.mxu0 0.0
    %736 = vmatpush1.msra.mxu0 0.0
    %737 = vmatprep.subr.mxu0 0.0
    %738 = vmatpush1.msra.mxu0 0.0
    %739 = vmatprep.subr.mxu0 0.0
    %740 = vmatpush1.msra.mxu0 0.0
    %741 = vmatprep.mubr.f32.mxu0 0.0
    %742 = vmatmul.mubr.f32.gmra.mrb[0].mxu0 %v203
    %v743 = vpop.f32.mrb[0].mxu0
    %v744 = vadd.f32 0.0, %v743
    %v745 = vpop.f32.mrb[0].mxu0
    %746 = vdwg.mxu0
    %v747 = vadd.f32 %v521, %v673
    %v748 = vadd.f32 %v523, %v675
    %v749 = vadd.f32 %v592, %v744
    %v750 = vsub.f32 %v747, %v282
    %v751 = vsub.f32 %v748, %v282
    %v752 = vsub.f32 %v749, %v282
    %v753 = vmul.f32 %v750, %v290
    %v754 = vmul.f32 %v751, %v290
    %v755 = vmul.f32 %v752, %v290
    %v756 = vmax.f32 %v753, 0.0
    %v757 = vmax.f32 %v754, 0.0
    %v758 = vmax.f32 %v755, 0.0
    %v759 = vld [vmem:[%s6] sm:$0x7]
    %v761 = vlaneseq
    %v762 = vshrl.u32 %v761, 7
    %v763 = vsub.s32 0, %v762
    %v764 = vrot.slane %v759, %v763
    %v765 = vlaneseq
    %v766 = vshrl.u32 %v765, 7
    %v767 = vsub.s32 1, %v766
    %v768 = vrot.slane %v759, %v767
    %v769 = vlaneseq
    %v770 = vshrl.u32 %v769, 7
    %v771 = vsub.s32 2, %v770
    %v772 = vrot.slane %v759, %v771
    %v776 = vmul.f32 %v756, %v764
    %v777 = vmul.f32 %v757, %v768
    %v778 = vmul.f32 %v758, %v772
    %v779 = vld [vmem:[%s4] sm:$0xff]
    %s780 = scalar_lea.vmem %s4, 8
    %v781 = vld [vmem:[%s780] sm:$0xff]
    %vm782 = vcmask 64512
    %v784 = vsel %vm782, %v781, 0
    %786 = vmatprep.subr.mxu0 0.0
    %787 = vmatpush1.msra.mxu0 %v777
    %788 = vmatprep.subr.mxu0 0.0
    %789 = vmatpush1.msra.mxu0 0.0
    %790 = vmatprep.subr.mxu0 0.0
    %791 = vmatpush1.msra.mxu0 0.0
    %792 = vmatprep.subr.mxu0 0.0
    %793 = vmatpush1.msra.mxu0 0.0
    %794 = vmatprep.subr.mxu0 0.0
    %795 = vmatpush1.msra.mxu0 0.0
    %796 = vmatprep.subr.mxu0 0.0
    %797 = vmatpush1.msra.mxu0 0.0
    %798 = vmatprep.subr.mxu0 0.0
    %799 = vmatpush1.msra.mxu0 0.0
    %800 = vmatprep.subr.mxu0 0.0
    %801 = vmatpush1.msra.mxu0 0.0
    %802 = vmatprep.subr.mxu0 0.0
    %803 = vmatpush1.msra.mxu0 0.0
    %804 = vmatprep.subr.mxu0 0.0
    %805 = vmatpush1.msra.mxu0 0.0
    %806 = vmatprep.subr.mxu0 0.0
    %807 = vmatpush1.msra.mxu0 0.0
    %808 = vmatprep.subr.mxu0 0.0
    %809 = vmatpush1.msra.mxu0 0.0
    %810 = vmatprep.subr.mxu0 0.0
    %811 = vmatpush1.msra.mxu0 0.0
    %812 = vmatprep.subr.mxu0 0.0
    %813 = vmatpush1.msra.mxu0 0.0
    %814 = vmatprep.subr.mxu0 0.0
    %815 = vmatpush1.msra.mxu0 0.0
    %816 = vmatprep.subr.mxu0 0.0
    %817 = vmatpush1.msra.mxu0 0.0
    %818 = vmatprep.subr.mxu0 0.0
    %819 = vmatpush1.msra.mxu0 0.0
    %820 = vmatprep.subr.mxu0 0.0
    %821 = vmatpush1.msra.mxu0 0.0
    %822 = vmatprep.subr.mxu0 0.0
    %823 = vmatpush1.msra.mxu0 0.0
    %824 = vmatprep.subr.mxu0 0.0
    %825 = vmatpush1.msra.mxu0 0.0
    %826 = vmatprep.subr.mxu0 0.0
    %827 = vmatpush1.msra.mxu0 0.0
    %828 = vmatprep.subr.mxu0 0.0
    %829 = vmatpush1.msra.mxu0 0.0
    %830 = vmatprep.subr.mxu0 0.0
    %831 = vmatpush1.msra.mxu0 0.0
    %832 = vmatprep.subr.mxu0 0.0
    %833 = vmatpush1.msra.mxu0 0.0
    %834 = vmatprep.subr.mxu0 0.0
    %835 = vmatpush1.msra.mxu0 0.0
    %836 = vmatprep.subr.mxu0 0.0
    %837 = vmatpush1.msra.mxu0 0.0
    %838 = vmatprep.subr.mxu0 0.0
    %839 = vmatpush1.msra.mxu0 0.0
    %840 = vmatprep.subr.mxu0 0.0
    %841 = vmatpush1.msra.mxu0 0.0
    %842 = vmatprep.subr.mxu0 0.0
    %843 = vmatpush1.msra.mxu0 0.0
    %844 = vmatprep.subr.mxu0 0.0
    %845 = vmatpush1.msra.mxu0 0.0
    %846 = vmatprep.subr.mxu0 0.0
    %847 = vmatpush1.msra.mxu0 0.0
    %848 = vmatprep.subr.mxu0 0.0
    %849 = vmatpush1.msra.mxu0 0.0
    %850 = vmatprep.mubr.f32.mxu0 0.0
    %851 = vmatmul.mubr.f32.gmra.mrb[0].mxu0 %v784
    %v852 = vpop.f32.mrb[0].mxu0
    %v853 = vadd.f32 0.0, %v852
    %v854 = vpop.f32.mrb[0].mxu0
    %855 = vdwg.mxu0
    %v857 = vsel %vm782, %v779, 0
    %859 = vmatprep.subr.mxu0 0.0
    %860 = vmatpush1.msra.mxu0 %v776
    %861 = vmatprep.subr.mxu0 0.0
    %862 = vmatpush1.msra.mxu0 0.0
    %863 = vmatprep.subr.mxu0 0.0
    %864 = vmatpush1.msra.mxu0 0.0
    %865 = vmatprep.subr.mxu0 0.0
    %866 = vmatpush1.msra.mxu0 0.0
    %867 = vmatprep.subr.mxu0 0.0
    %868 = vmatpush1.msra.mxu0 0.0
    %869 = vmatprep.subr.mxu0 0.0
    %870 = vmatpush1.msra.mxu0 0.0
    %871 = vmatprep.subr.mxu0 0.0
    %872 = vmatpush1.msra.mxu0 0.0
    %873 = vmatprep.subr.mxu0 0.0
    %874 = vmatpush1.msra.mxu0 0.0
    %875 = vmatprep.subr.mxu0 0.0
    %876 = vmatpush1.msra.mxu0 0.0
    %877 = vmatprep.subr.mxu0 0.0
    %878 = vmatpush1.msra.mxu0 0.0
    %879 = vmatprep.subr.mxu0 0.0
    %880 = vmatpush1.msra.mxu0 0.0
    %881 = vmatprep.subr.mxu0 0.0
    %882 = vmatpush1.msra.mxu0 0.0
    %883 = vmatprep.subr.mxu0 0.0
    %884 = vmatpush1.msra.mxu0 0.0
    %885 = vmatprep.subr.mxu0 0.0
    %886 = vmatpush1.msra.mxu0 0.0
    %887 = vmatprep.subr.mxu0 0.0
    %888 = vmatpush1.msra.mxu0 0.0
    %889 = vmatprep.subr.mxu0 0.0
    %890 = vmatpush1.msra.mxu0 0.0
    %891 = vmatprep.subr.mxu0 0.0
    %892 = vmatpush1.msra.mxu0 0.0
    %893 = vmatprep.subr.mxu0 0.0
    %894 = vmatpush1.msra.mxu0 0.0
    %895 = vmatprep.subr.mxu0 0.0
    %896 = vmatpush1.msra.mxu0 0.0
    %897 = vmatprep.subr.mxu0 0.0
    %898 = vmatpush1.msra.mxu0 0.0
    %899 = vmatprep.subr.mxu0 0.0
    %900 = vmatpush1.msra.mxu0 0.0
    %901 = vmatprep.subr.mxu0 0.0
    %902 = vmatpush1.msra.mxu0 0.0
    %903 = vmatprep.subr.mxu0 0.0
    %904 = vmatpush1.msra.mxu0 0.0
    %905 = vmatprep.subr.mxu0 0.0
    %906 = vmatpush1.msra.mxu0 0.0
    %907 = vmatprep.subr.mxu0 0.0
    %908 = vmatpush1.msra.mxu0 0.0
    %909 = vmatprep.subr.mxu0 0.0
    %910 = vmatpush1.msra.mxu0 0.0
    %911 = vmatprep.subr.mxu0 0.0
    %912 = vmatpush1.msra.mxu0 0.0
    %913 = vmatprep.subr.mxu0 0.0
    %914 = vmatpush1.msra.mxu0 0.0
    %915 = vmatprep.subr.mxu0 0.0
    %916 = vmatpush1.msra.mxu0 0.0
    %917 = vmatprep.subr.mxu0 0.0
    %918 = vmatpush1.msra.mxu0 0.0
    %919 = vmatprep.subr.mxu0 0.0
    %920 = vmatpush1.msra.mxu0 0.0
    %921 = vmatprep.subr.mxu0 0.0
    %922 = vmatpush1.msra.mxu0 0.0
    %923 = vmatprep.mubr.f32.mxu0 0.0
    %924 = vmatmul.mubr.f32.gmra.mrb[0].mxu0 %v857
    %v925 = vpop.f32.mrb[0].mxu0
    %v926 = vadd.f32 %v853, %v925
    %v927 = vpop.f32.mrb[0].mxu0
    %928 = vdwg.mxu0
    %s929 = scalar_lea.vmem %s4, 16
    %v930 = vld [vmem:[%s929] sm:$0xff]
    %v932 = vsel %vm782, %v930, 0
    %934 = vmatprep.subr.mxu0 0.0
    %935 = vmatpush1.msra.mxu0 %v778
    %936 = vmatprep.subr.mxu0 0.0
    %937 = vmatpush1.msra.mxu0 0.0
    %938 = vmatprep.subr.mxu0 0.0
    %939 = vmatpush1.msra.mxu0 0.0
    %940 = vmatprep.subr.mxu0 0.0
    %941 = vmatpush1.msra.mxu0 0.0
    %942 = vmatprep.subr.mxu0 0.0
    %943 = vmatpush1.msra.mxu0 0.0
    %944 = vmatprep.subr.mxu0 0.0
    %945 = vmatpush1.msra.mxu0 0.0
    %946 = vmatprep.subr.mxu0 0.0
    %947 = vmatpush1.msra.mxu0 0.0
    %948 = vmatprep.subr.mxu0 0.0
    %949 = vmatpush1.msra.mxu0 0.0
    %950 = vmatprep.subr.mxu0 0.0
    %951 = vmatpush1.msra.mxu0 0.0
    %952 = vmatprep.subr.mxu0 0.0
    %953 = vmatpush1.msra.mxu0 0.0
    %954 = vmatprep.subr.mxu0 0.0
    %955 = vmatpush1.msra.mxu0 0.0
    %956 = vmatprep.subr.mxu0 0.0
    %957 = vmatpush1.msra.mxu0 0.0
    %958 = vmatprep.subr.mxu0 0.0
    %959 = vmatpush1.msra.mxu0 0.0
    %960 = vmatprep.subr.mxu0 0.0
    %961 = vmatpush1.msra.mxu0 0.0
    %962 = vmatprep.subr.mxu0 0.0
    %963 = vmatpush1.msra.mxu0 0.0
    %964 = vmatprep.subr.mxu0 0.0
    %965 = vmatpush1.msra.mxu0 0.0
    %966 = vmatprep.subr.mxu0 0.0
    %967 = vmatpush1.msra.mxu0 0.0
    %968 = vmatprep.subr.mxu0 0.0
    %969 = vmatpush1.msra.mxu0 0.0
    %970 = vmatprep.subr.mxu0 0.0
    %971 = vmatpush1.msra.mxu0 0.0
    %972 = vmatprep.subr.mxu0 0.0
    %973 = vmatpush1.msra.mxu0 0.0
    %974 = vmatprep.subr.mxu0 0.0
    %975 = vmatpush1.msra.mxu0 0.0
    %976 = vmatprep.subr.mxu0 0.0
    %977 = vmatpush1.msra.mxu0 0.0
    %978 = vmatprep.subr.mxu0 0.0
    %979 = vmatpush1.msra.mxu0 0.0
    %980 = vmatprep.subr.mxu0 0.0
    %981 = vmatpush1.msra.mxu0 0.0
    %982 = vmatprep.subr.mxu0 0.0
    %983 = vmatpush1.msra.mxu0 0.0
    %984 = vmatprep.subr.mxu0 0.0
    %985 = vmatpush1.msra.mxu0 0.0
    %986 = vmatprep.subr.mxu0 0.0
    %987 = vmatpush1.msra.mxu0 0.0
    %988 = vmatprep.subr.mxu0 0.0
    %989 = vmatpush1.msra.mxu0 0.0
    %990 = vmatprep.subr.mxu0 0.0
    %991 = vmatpush1.msra.mxu0 0.0
    %992 = vmatprep.subr.mxu0 0.0
    %993 = vmatpush1.msra.mxu0 0.0
    %994 = vmatprep.subr.mxu0 0.0
    %995 = vmatpush1.msra.mxu0 0.0
    %996 = vmatprep.subr.mxu0 0.0
    %997 = vmatpush1.msra.mxu0 0.0
    %998 = vmatprep.mubr.f32.mxu0 0.0
    %999 = vmatmul.mubr.f32.gmra.mrb[0].mxu0 %v932
    %v1000 = vpop.f32.mrb[0].mxu0
    %v1001 = vadd.f32 0.0, %v1000
    %v1002 = vpop.f32.mrb[0].mxu0
    %1003 = vdwg.mxu0
    %v1004 = vadd.f32 %v926, %v1001
    %v1005 = vld [vmem:[%s2] sm:$0xff]
    %v1006 = vld [vmem:[%s2 + $0x8] sm:$0xff]
    %v1007 = vmax.f32 %v1005, %v1006
    %v1008 = vld [vmem:[%s5] sm:$0xff]
    %s1009 = scalar_lea.vmem %s5, 8
    %v1010 = vld [vmem:[%s1009] sm:$0xff]
    %v1012 = vcombine.high %v1007, %v1007
    %1013 = vrot.lane.b32.xlu0 %v1007, 126
    %v1014 = vpop.permute.xlu0 %1013
    %1015 = vrot.lane.b32.xlu0 %v1012, 126
    %v1016 = vpop.permute.xlu0 %1015
    %vm1017 = vcmask 1031168
    %v1018 = vsel %vm1017, %v1014, %v1016
    %v1020 = vsel %vm46, %v1010, 0
    %v1022 = vsel %vm50, %v1018, 0
    %1024 = vmatprep.subr.mxu0 0.0
    %1025 = vmatpush1.msra.mxu0 %v1022
    %1026 = vmatprep.subr.mxu0 0.0
    %1027 = vmatpush1.msra.mxu0 0.0
    %1028 = vmatprep.subr.mxu0 0.0
    %1029 = vmatpush1.msra.mxu0 0.0
    %1030 = vmatprep.subr.mxu0 0.0
    %1031 = vmatpush1.msra.mxu0 0.0
    %1032 = vmatprep.subr.mxu0 0.0
    %1033 = vmatpush1.msra.mxu0 0.0
    %1034 = vmatprep.subr.mxu0 0.0
    %1035 = vmatpush1.msra.mxu0 0.0
    %1036 = vmatprep.subr.mxu0 0.0
    %1037 = vmatpush1.msra.mxu0 0.0
    %1038 = vmatprep.subr.mxu0 0.0
    %1039 = vmatpush1.msra.mxu0 0.0
    %1040 = vmatprep.subr.mxu0 0.0
    %1041 = vmatpush1.msra.mxu0 0.0
    %1042 = vmatprep.subr.mxu0 0.0
    %1043 = vmatpush1.msra.mxu0 0.0
    %1044 = vmatprep.subr.mxu0 0.0
    %1045 = vmatpush1.msra.mxu0 0.0
    %1046 = vmatprep.subr.mxu0 0.0
    %1047 = vmatpush1.msra.mxu0 0.0
    %1048 = vmatprep.subr.mxu0 0.0
    %1049 = vmatpush1.msra.mxu0 0.0
    %1050 = vmatprep.subr.mxu0 0.0
    %1051 = vmatpush1.msra.mxu0 0.0
    %1052 = vmatprep.subr.mxu0 0.0
    %1053 = vmatpush1.msra.mxu0 0.0
    %1054 = vmatprep.subr.mxu0 0.0
    %1055 = vmatpush1.msra.mxu0 0.0
    %1056 = vmatprep.subr.mxu0 0.0
    %1057 = vmatpush1.msra.mxu0 0.0
    %1058 = vmatprep.subr.mxu0 0.0
    %1059 = vmatpush1.msra.mxu0 0.0
    %1060 = vmatprep.subr.mxu0 0.0
    %1061 = vmatpush1.msra.mxu0 0.0
    %1062 = vmatprep.subr.mxu0 0.0
    %1063 = vmatpush1.msra.mxu0 0.0
    %1064 = vmatprep.subr.mxu0 0.0
    %1065 = vmatpush1.msra.mxu0 0.0
    %1066 = vmatprep.subr.mxu0 0.0
    %1067 = vmatpush1.msra.mxu0 0.0
    %1068 = vmatprep.subr.mxu0 0.0
    %1069 = vmatpush1.msra.mxu0 0.0
    %1070 = vmatprep.subr.mxu0 0.0
    %1071 = vmatpush1.msra.mxu0 0.0
    %1072 = vmatprep.subr.mxu0 0.0
    %1073 = vmatpush1.msra.mxu0 0.0
    %1074 = vmatprep.subr.mxu0 0.0
    %1075 = vmatpush1.msra.mxu0 0.0
    %1076 = vmatprep.subr.mxu0 0.0
    %1077 = vmatpush1.msra.mxu0 0.0
    %1078 = vmatprep.subr.mxu0 0.0
    %1079 = vmatpush1.msra.mxu0 0.0
    %1080 = vmatprep.subr.mxu0 0.0
    %1081 = vmatpush1.msra.mxu0 0.0
    %1082 = vmatprep.subr.mxu0 0.0
    %1083 = vmatpush1.msra.mxu0 0.0
    %1084 = vmatprep.subr.mxu0 0.0
    %1085 = vmatpush1.msra.mxu0 0.0
    %1086 = vmatprep.subr.mxu0 0.0
    %1087 = vmatpush1.msra.mxu0 0.0
    %1088 = vmatprep.mubr.f32.mxu0 0.0
    %1089 = vmatmul.mubr.f32.gmra.mrb[0].mxu0 %v1020
    %v1090 = vpop.f32.mrb[0].mxu0
    %v1091 = vadd.f32 0.0, %v1090
    %v1092 = vpop.f32.mrb[0].mxu0
    %1093 = vdwg.mxu0
    %v1095 = vsel %vm46, %v1008, 0
    %v1097 = vsel %vm50, %v1007, 0
    %1099 = vmatprep.subr.mxu0 0.0
    %1100 = vmatpush1.msra.mxu0 %v1097
    %1101 = vmatprep.subr.mxu0 0.0
    %1102 = vmatpush1.msra.mxu0 0.0
    %1103 = vmatprep.subr.mxu0 0.0
    %1104 = vmatpush1.msra.mxu0 0.0
    %1105 = vmatprep.subr.mxu0 0.0
    %1106 = vmatpush1.msra.mxu0 0.0
    %1107 = vmatprep.subr.mxu0 0.0
    %1108 = vmatpush1.msra.mxu0 0.0
    %1109 = vmatprep.subr.mxu0 0.0
    %1110 = vmatpush1.msra.mxu0 0.0
    %1111 = vmatprep.subr.mxu0 0.0
    %1112 = vmatpush1.msra.mxu0 0.0
    %1113 = vmatprep.subr.mxu0 0.0
    %1114 = vmatpush1.msra.mxu0 0.0
    %1115 = vmatprep.subr.mxu0 0.0
    %1116 = vmatpush1.msra.mxu0 0.0
    %1117 = vmatprep.subr.mxu0 0.0
    %1118 = vmatpush1.msra.mxu0 0.0
    %1119 = vmatprep.subr.mxu0 0.0
    %1120 = vmatpush1.msra.mxu0 0.0
    %1121 = vmatprep.subr.mxu0 0.0
    %1122 = vmatpush1.msra.mxu0 0.0
    %1123 = vmatprep.subr.mxu0 0.0
    %1124 = vmatpush1.msra.mxu0 0.0
    %1125 = vmatprep.subr.mxu0 0.0
    %1126 = vmatpush1.msra.mxu0 0.0
    %1127 = vmatprep.subr.mxu0 0.0
    %1128 = vmatpush1.msra.mxu0 0.0
    %1129 = vmatprep.subr.mxu0 0.0
    %1130 = vmatpush1.msra.mxu0 0.0
    %1131 = vmatprep.subr.mxu0 0.0
    %1132 = vmatpush1.msra.mxu0 0.0
    %1133 = vmatprep.subr.mxu0 0.0
    %1134 = vmatpush1.msra.mxu0 0.0
    %1135 = vmatprep.subr.mxu0 0.0
    %1136 = vmatpush1.msra.mxu0 0.0
    %1137 = vmatprep.subr.mxu0 0.0
    %1138 = vmatpush1.msra.mxu0 0.0
    %1139 = vmatprep.subr.mxu0 0.0
    %1140 = vmatpush1.msra.mxu0 0.0
    %1141 = vmatprep.subr.mxu0 0.0
    %1142 = vmatpush1.msra.mxu0 0.0
    %1143 = vmatprep.subr.mxu0 0.0
    %1144 = vmatpush1.msra.mxu0 0.0
    %1145 = vmatprep.subr.mxu0 0.0
    %1146 = vmatpush1.msra.mxu0 0.0
    %1147 = vmatprep.subr.mxu0 0.0
    %1148 = vmatpush1.msra.mxu0 0.0
    %1149 = vmatprep.subr.mxu0 0.0
    %1150 = vmatpush1.msra.mxu0 0.0
    %1151 = vmatprep.subr.mxu0 0.0
    %1152 = vmatpush1.msra.mxu0 0.0
    %1153 = vmatprep.subr.mxu0 0.0
    %1154 = vmatpush1.msra.mxu0 0.0
    %1155 = vmatprep.subr.mxu0 0.0
    %1156 = vmatpush1.msra.mxu0 0.0
    %1157 = vmatprep.subr.mxu0 0.0
    %1158 = vmatpush1.msra.mxu0 0.0
    %1159 = vmatprep.subr.mxu0 0.0
    %1160 = vmatpush1.msra.mxu0 0.0
    %1161 = vmatprep.subr.mxu0 0.0
    %1162 = vmatpush1.msra.mxu0 0.0
    %1163 = vmatprep.mubr.f32.mxu0 0.0
    %1164 = vmatmul.mubr.f32.gmra.mrb[0].mxu0 %v1095
    %v1165 = vpop.f32.mrb[0].mxu0
    %v1166 = vadd.f32 %v1091, %v1165
    %v1167 = vpop.f32.mrb[0].mxu0
    %1168 = vdwg.mxu0
    %s1169 = scalar_lea.vmem %s5, 16
    %v1170 = vld [vmem:[%s1169] sm:$0xff]
    %1171 = vrot.lane.b32.xlu0 %v1007, 124
    %v1172 = vpop.permute.xlu0 %1171
    %1173 = vrot.lane.b32.xlu0 %v1012, 124
    %v1174 = vpop.permute.xlu0 %1173
    %vm1175 = vcmask 1014784
    %v1176 = vsel %vm1175, %v1172, %v1174
    %v1178 = vsel %vm46, %v1170, 0
    %v1180 = vsel %vm50, %v1176, 0
    %1182 = vmatprep.subr.mxu0 0.0
    %1183 = vmatpush1.msra.mxu0 %v1180
    %1184 = vmatprep.subr.mxu0 0.0
    %1185 = vmatpush1.msra.mxu0 0.0
    %1186 = vmatprep.subr.mxu0 0.0
    %1187 = vmatpush1.msra.mxu0 0.0
    %1188 = vmatprep.subr.mxu0 0.0
    %1189 = vmatpush1.msra.mxu0 0.0
    %1190 = vmatprep.subr.mxu0 0.0
    %1191 = vmatpush1.msra.mxu0 0.0
    %1192 = vmatprep.subr.mxu0 0.0
    %1193 = vmatpush1.msra.mxu0 0.0
    %1194 = vmatprep.subr.mxu0 0.0
    %1195 = vmatpush1.msra.mxu0 0.0
    %1196 = vmatprep.subr.mxu0 0.0
    %1197 = vmatpush1.msra.mxu0 0.0
    %1198 = vmatprep.subr.mxu0 0.0
    %1199 = vmatpush1.msra.mxu0 0.0
    %1200 = vmatprep.subr.mxu0 0.0
    %1201 = vmatpush1.msra.mxu0 0.0
    %1202 = vmatprep.subr.mxu0 0.0
    %1203 = vmatpush1.msra.mxu0 0.0
    %1204 = vmatprep.subr.mxu0 0.0
    %1205 = vmatpush1.msra.mxu0 0.0
    %1206 = vmatprep.subr.mxu0 0.0
    %1207 = vmatpush1.msra.mxu0 0.0
    %1208 = vmatprep.subr.mxu0 0.0
    %1209 = vmatpush1.msra.mxu0 0.0
    %1210 = vmatprep.subr.mxu0 0.0
    %1211 = vmatpush1.msra.mxu0 0.0
    %1212 = vmatprep.subr.mxu0 0.0
    %1213 = vmatpush1.msra.mxu0 0.0
    %1214 = vmatprep.subr.mxu0 0.0
    %1215 = vmatpush1.msra.mxu0 0.0
    %1216 = vmatprep.subr.mxu0 0.0
    %1217 = vmatpush1.msra.mxu0 0.0
    %1218 = vmatprep.subr.mxu0 0.0
    %1219 = vmatpush1.msra.mxu0 0.0
    %1220 = vmatprep.subr.mxu0 0.0
    %1221 = vmatpush1.msra.mxu0 0.0
    %1222 = vmatprep.subr.mxu0 0.0
    %1223 = vmatpush1.msra.mxu0 0.0
    %1224 = vmatprep.subr.mxu0 0.0
    %1225 = vmatpush1.msra.mxu0 0.0
    %1226 = vmatprep.subr.mxu0 0.0
    %1227 = vmatpush1.msra.mxu0 0.0
    %1228 = vmatprep.subr.mxu0 0.0
    %1229 = vmatpush1.msra.mxu0 0.0
    %1230 = vmatprep.subr.mxu0 0.0
    %1231 = vmatpush1.msra.mxu0 0.0
    %1232 = vmatprep.subr.mxu0 0.0
    %1233 = vmatpush1.msra.mxu0 0.0
    %1234 = vmatprep.subr.mxu0 0.0
    %1235 = vmatpush1.msra.mxu0 0.0
    %1236 = vmatprep.subr.mxu0 0.0
    %1237 = vmatpush1.msra.mxu0 0.0
    %1238 = vmatprep.subr.mxu0 0.0
    %1239 = vmatpush1.msra.mxu0 0.0
    %1240 = vmatprep.subr.mxu0 0.0
    %1241 = vmatpush1.msra.mxu0 0.0
    %1242 = vmatprep.subr.mxu0 0.0
    %1243 = vmatpush1.msra.mxu0 0.0
    %1244 = vmatprep.subr.mxu0 0.0
    %1245 = vmatpush1.msra.mxu0 0.0
    %1246 = vmatprep.mubr.f32.mxu0 0.0
    %1247 = vmatmul.mubr.f32.gmra.mrb[0].mxu0 %v1178
    %v1248 = vpop.f32.mrb[0].mxu0
    %v1249 = vadd.f32 0.0, %v1248
    %v1250 = vpop.f32.mrb[0].mxu0
    %1251 = vdwg.mxu0
    %v1252 = vadd.f32 %v1166, %v1249
    %v1253 = vadd.f32 %v1004, %v1252
    %v1254 = vlaneseq
    %v1255 = vand.u32 %v1254, 127
    %vm1256 = vcmp.lt.s32.totalorder %v1255, 16
    %v1257 = vsel %vm1256, %v1253, 0.0
    %1258 = vadd.xlane.f32.xlu0 %v1257
    %v1259 = vpop.xlane.xlu0 %1258
    %v1260 = vmul.f32 %v1259, 0.0625
    %v1261 = vsub.f32 %v1253, %v1260
    %v1262 = vsel %vm1256, %v1261, 0.0
    %v1263 = vmul.f32 %v1262, %v1262
    %1264 = vadd.xlane.f32.xlu0 %v1263
    %v1265 = vpop.xlane.xlu0 %1264
    %v1266 = vmul.f32 %v1265, 0.0625
    %v1267 = vadd.f32 %v1266, 1e-05
    %v1268 = vrsqrt.pop %v1267
    %v1269 = vmul.f32 %v1261, %v1268
    %v1270 = vmax.f32 %v1269, 0.0
    %v1271 = vsel %vm1256, %v1270, 0.0
    %1272 = vst [vmem:[#allocation5] sm:$0xff] %v1271
    %1273 = vst [vmem:[#allocation5 + $0x8] sm:$0xff] %v1004
    // Predicated region
    $region34: #{tpu_custom_call.1} parent=1 // pred_check
      _
    $region35: #{tpu_custom_call.1} parent=1 // pred_check_branch
      %1275 = sbr.rel (0) target = $region37
    $region36: #{tpu_custom_call.1} parent=1 // pred_region
      %s1277 = ssub.s32 256, 256
      %1278 = vsyncadd [#allocation4], %s1277
      %s1280 = sshll.u32 [#allocation5], 4
      %s1281 = int_to_ptr.vmem [resolvable:$true] %s1280
      %1283 = dma.vmem_to_hbm [thread:$0]  %s1281, 256, %s7, [#allocation4]
    $region37: #{tpu_custom_call.1} parent=1 // pred_fallthru
      _
    // Predicated region
    $region38: #{tpu_custom_call.1} parent=1 // pred_check
      _
    $region39: #{tpu_custom_call.1} parent=1 // pred_check_branch
      %1285 = sbr.rel (0) target = $region41
    $region40: #{tpu_custom_call.1} parent=1 // pred_region
      %1286 = dma.done [#allocation4], 256
    $region41: #{tpu_custom_call.1} parent=1 // pred_fallthru
      _
    %1287 = vsyncpa [#allocation3], 1
    %1288 = vsyncpa [#allocation4], 1

</llo_original>
